<compile_context>
chip_gen: v7x
topology: tpu7x:2x2x1
jax: 0.10.0
libtpu: 0.0.40
codegen_flags: <defaults>
</compile_context>

<pallas_src>
import jax
import jax.numpy as jnp
import numpy as np
from jax import lax
from jax.experimental import pallas as pl
from jax.experimental.pallas import tpu as pltpu

# --- config mirrors CFG (mt5-small: d_model=512, input_shape=(512, 45)) ---
C_IN = 45            # CFG.input_shape[-1]  (conv in_channels)
NUM_FILTERS = 128
KERNEL_SIZES = (3, 5, 7)
HID = 512            # CFG.trf_hiddim
MAX_K = max(KERNEL_SIZES)
PAD = MAX_K // 2     # 3 (zero-pad the input once for the widest kernel)
BN_EPS = 1e-5
N_CONV = len(KERNEL_SIZES)
N_FEAT = N_CONV * NUM_FILTERS   # 384


# ----------------------------- Pallas kernel --------------------------------
def trans3_kernel(x_ref, w_ref, b_ref, wfc_ref, bfc_ref, out_ref):
    # x_ref:   (Bb, L + 2*PAD, C_IN)   zero-padded input block (Bb batch elems)
    # w_ref:   (MAX_K, C_IN, N_FEAT)   per-tap merged conv weights (all 3 convs)
    # b_ref:   (1, N_FEAT)             concatenated conv biases
    # wfc_ref: (N_FEAT, HID)           FC weight with eval-mode BN scale folded in
    # bfc_ref: (1, HID)                FC bias with eval-mode BN shift folded in
    # out_ref: (Bb, L, HID)
    Bb, L, _ = out_ref.shape
    M = Bb * L
    x = x_ref[...]                                        # (Bb, Lp, C_IN)

    # Conv-as-shifted-matmul: 7 taps, each a (M, 45) @ (45, 384) MXU dot, all
    # accumulated into one (M, 384) buffer with no VPU work in between.
    acc = jnp.zeros((M, N_FEAT), jnp.float32)
    for t in range(MAX_K):
        xt = x[:, t:t + L, :].reshape(M, C_IN)            # each shifted slice used once
        acc = acc + jnp.dot(xt, w_ref[t], preferred_element_type=jnp.float32)

    z = jnp.maximum(acc + b_ref[...], 0.0)                # conv bias + ReLU
    # BatchNorm (eval-mode) is folded into wfc/bfc, so go straight to the FC.
    emb = jnp.dot(z, wfc_ref[...], preferred_element_type=jnp.float32) + bfc_ref[...]
    out_ref[...] = emb.reshape(Bb, L, HID).astype(out_ref.dtype)


def _pick_block_b(B, max_b=8):
    """Largest divisor of B that is <= max_b (batch elements per grid step)."""
    for d in range(min(B, max_b), 0, -1):
        if B % d == 0:
            return d
    return 1


def trans3_pallas(x, w, b, wfc, bfc, block_b=None):
    B, L, _ = x.shape
    if block_b is None:
        block_b = _pick_block_b(B)
    x_pad = jnp.pad(x, ((0, 0), (PAD, PAD), (0, 0)))      # pad once for k=7
    Lp = L + 2 * PAD
    grid = (B // block_b,)
    return pl.pallas_call(
        trans3_kernel,
        out_shape=jax.ShapeDtypeStruct((B, L, HID), jnp.float32),
        grid=grid,
        in_specs=[
            pl.BlockSpec((block_b, Lp, C_IN), lambda bi: (bi, 0, 0)),
            pl.BlockSpec((MAX_K, C_IN, N_FEAT), lambda bi: (0, 0, 0)),
            pl.BlockSpec((1, N_FEAT), lambda bi: (0, 0)),
            pl.BlockSpec((N_FEAT, HID), lambda bi: (0, 0)),
            pl.BlockSpec((1, HID), lambda bi: (0, 0)),
        ],
        out_specs=pl.BlockSpec((block_b, L, HID), lambda bi: (bi, 0, 0)),
        compiler_params=pltpu.CompilerParams(
            dimension_semantics=("parallel",),
            vmem_limit_bytes=64 * 1024 * 1024,
        ),
    )(x_pad, w, b, wfc, bfc)


# -------------------- deterministic parameter construction ------------------
def init_params(key):
    keys = iter(jax.random.split(key, 32))
    p = {"conv_w": [], "conv_b": [], "bn_g": [], "bn_b": [], "bn_m": [], "bn_v": []}
    for k in KERNEL_SIZES:
        # PyTorch Conv1d weight layout: (out_channels, in_channels, k)
        p["conv_w"].append(0.05 * jax.random.normal(next(keys), (NUM_FILTERS, C_IN, k), jnp.float32))
        p["conv_b"].append(0.05 * jax.random.normal(next(keys), (NUM_FILTERS,), jnp.float32))
        p["bn_g"].append(1.0 + 0.1 * jax.random.normal(next(keys), (NUM_FILTERS,), jnp.float32))
        p["bn_b"].append(0.1 * jax.random.normal(next(keys), (NUM_FILTERS,), jnp.float32))
        p["bn_m"].append(0.1 * jax.random.normal(next(keys), (NUM_FILTERS,), jnp.float32))
        p["bn_v"].append(jax.random.uniform(next(keys), (NUM_FILTERS,), jnp.float32, 0.5, 1.5))
    # PyTorch Linear weight layout: (out_features, in_features)
    p["fc_w"] = 0.05 * jax.random.normal(next(keys), (HID, N_CONV * NUM_FILTERS), jnp.float32)
    p["fc_b"] = 0.05 * jax.random.normal(next(keys), (HID,), jnp.float32)
    return p


def pack_kernel_params(p):
    """Merge the three convs into one per-tap weight tensor (each conv's k real
    taps centered inside the shared 7-tap padded window), concatenate conv
    biases, and fold eval-mode BatchNorm into the FC weight/bias."""
    w = jnp.zeros((MAX_K, C_IN, N_FEAT), jnp.float32)
    for i, k in enumerate(KERNEL_SIZES):
        wt = jnp.transpose(p["conv_w"][i], (2, 1, 0))          # (k, C_IN, 128)
        t0 = PAD - k // 2
        w = w.at[t0:t0 + k, :, i * NUM_FILTERS:(i + 1) * NUM_FILTERS].set(wt)
    b = jnp.concatenate(p["conv_b"], axis=0)[None, :]          # (1, 384)

    inv_std = [p["bn_g"][i] / jnp.sqrt(p["bn_v"][i] + BN_EPS) for i in range(N_CONV)]
    scale = jnp.concatenate(inv_std)                                           # (384,)
    shift = jnp.concatenate([p["bn_b"][i] - p["bn_m"][i] * inv_std[i]
                             for i in range(N_CONV)])                          # (384,)

    wfc = p["fc_w"].T                                          # (384, 512)
    wfc_folded = scale[:, None] * wfc                          # BN scale folded
    bfc_folded = (shift @ wfc + p["fc_b"])[None, :]            # BN shift folded
    return w, b, wfc_folded, bfc_folded


# ------------------------- pure-JAX reference (check) -----------------------
def trans3_ref(x, p):
    xt = jnp.transpose(x, (0, 2, 1))                           # (B, C_IN, L)  (== x.permute(0,2,1))
    outs = []
    for i, k in enumerate(KERNEL_SIZES):
        y = lax.conv_general_dilated(
            xt, p["conv_w"][i], window_strides=(1,), padding=[(k // 2, k // 2)],
            dimension_numbers=("NCH", "OIH", "NCH"))
        y = y + p["conv_b"][i][None, :, None]
        y = jnp.maximum(y, 0.0)
        y = ((y - p["bn_m"][i][None, :, None])
             / jnp.sqrt(p["bn_v"][i][None, :, None] + BN_EPS)
             * p["bn_g"][i][None, :, None] + p["bn_b"][i][None, :, None])
        outs.append(y)
    cat = jnp.concatenate(outs, axis=1)                        # (B, 384, L)
    cat = jnp.transpose(cat, (0, 2, 1))                        # (B, L, 384)
    return cat @ p["fc_w"].T + p["fc_b"]


if __name__ == "__main__":
    key = jax.random.PRNGKey(0)
    kx, kp = jax.random.split(key)
    B, L = 2, 16                                               # small batch / seq
    x = jax.random.normal(kx, (B, L, C_IN), jnp.float32)

    params = init_params(kp)
    packed = pack_kernel_params(params)

    out = trans3_pallas(x, *packed)
    out = jax.block_until_ready(out)

    ref = trans3_ref(x, params)
    np.testing.assert_allclose(np.asarray(out), np.asarray(ref), rtol=1e-3, atol=1e-3)
    print("KERNEL_OK")
</pallas_src>

<mosaic_0001>
module attributes {stable_mosaic.version = 11 : i64} {
  func.func @trans3_kernel(%arg0: i32, %arg1: memref<2x22x45xf32, #tpu.memory_space<vmem>>, %arg2: memref<7x45x384xf32, #tpu.memory_space<vmem>>, %arg3: memref<1x384xf32, #tpu.memory_space<vmem>>, %arg4: memref<384x512xf32, #tpu.memory_space<vmem>>, %arg5: memref<1x512xf32, #tpu.memory_space<vmem>>, %arg6: memref<2x16x512xf32, #tpu.memory_space<vmem>>) attributes {dimension_semantics = [#tpu.dimension_semantics<parallel>], iteration_bounds = array<i64: 1>, scalar_prefetch = 0 : i64, scratch_operands = 0 : i64, tpu.core_type = #tpu.core_type<tc>, window_params = [{transform_indices = @transform_0, window_bounds = array<i64: 2, 22, 45>}, {pipeline_mode = #tpu.pipeline_mode<synchronous>, transform_indices = @transform_1, window_bounds = array<i64: 7, 45, 384>}, {pipeline_mode = #tpu.pipeline_mode<synchronous>, transform_indices = @transform_2, window_bounds = array<i64: 1, 384>}, {pipeline_mode = #tpu.pipeline_mode<synchronous>, transform_indices = @transform_3, window_bounds = array<i64: 384, 512>}, {pipeline_mode = #tpu.pipeline_mode<synchronous>, transform_indices = @transform_4, window_bounds = array<i64: 1, 512>}, {transform_indices = @transform_5, window_bounds = array<i64: 2, 16, 512>}]} {
    %c0 = arith.constant 0 : index
    %c0_0 = arith.constant 0 : index
    %c0_1 = arith.constant 0 : index
    %0 = vector.load %arg1[%c0, %c0_0, %c0_1] : memref<2x22x45xf32, #tpu.memory_space<vmem>>, vector<2x22x45xf32>
    %cst = arith.constant 0.000000e+00 : f32
    %1 = vector.broadcast %cst : f32 to vector<32x384xf32>
    %2 = vector.extract_strided_slice %0 {offsets = [0, 0, 0], sizes = [2, 16, 45], strides = [1, 1, 1]} : vector<2x22x45xf32> to vector<2x16x45xf32>
    %3 = vector.shape_cast %2 : vector<2x16x45xf32> to vector<32x45xf32>
    %c0_2 = arith.constant 0 : index
    %c0_3 = arith.constant 0 : index
    %c0_4 = arith.constant 0 : index
    %4 = vector.load %arg2[%c0_2, %c0_3, %c0_4] : memref<7x45x384xf32, #tpu.memory_space<vmem>>, vector<1x45x384xf32>
    %5 = vector.shape_cast %4 : vector<1x45x384xf32> to vector<45x384xf32>
    %cst_5 = arith.constant dense<0.000000e+00> : vector<32x384xf32>
    %6 = tpu.matmul %3, %5, %cst_5 {dimension_numbers = #tpu.dot_dimension_numbers<[1], [0], [0], [1], [0, 0, 1, 1], [], []>} : vector<32x45xf32>, vector<45x384xf32>, vector<32x384xf32> -> vector<32x384xf32>
    %7 = arith.addf %1, %6 : vector<32x384xf32>
    %8 = vector.extract_strided_slice %0 {offsets = [0, 1, 0], sizes = [2, 16, 45], strides = [1, 1, 1]} : vector<2x22x45xf32> to vector<2x16x45xf32>
    %9 = vector.shape_cast %8 : vector<2x16x45xf32> to vector<32x45xf32>
    %c1 = arith.constant 1 : index
    %c0_6 = arith.constant 0 : index
    %c0_7 = arith.constant 0 : index
    %10 = vector.load %arg2[%c1, %c0_6, %c0_7] : memref<7x45x384xf32, #tpu.memory_space<vmem>>, vector<1x45x384xf32>
    %11 = vector.shape_cast %10 : vector<1x45x384xf32> to vector<45x384xf32>
    %cst_8 = arith.constant dense<0.000000e+00> : vector<32x384xf32>
    %12 = tpu.matmul %9, %11, %cst_8 {dimension_numbers = #tpu.dot_dimension_numbers<[1], [0], [0], [1], [0, 0, 1, 1], [], []>} : vector<32x45xf32>, vector<45x384xf32>, vector<32x384xf32> -> vector<32x384xf32>
    %13 = arith.addf %7, %12 : vector<32x384xf32>
    %14 = vector.extract_strided_slice %0 {offsets = [0, 2, 0], sizes = [2, 16, 45], strides = [1, 1, 1]} : vector<2x22x45xf32> to vector<2x16x45xf32>
    %15 = vector.shape_cast %14 : vector<2x16x45xf32> to vector<32x45xf32>
    %c2 = arith.constant 2 : index
    %c0_9 = arith.constant 0 : index
    %c0_10 = arith.constant 0 : index
    %16 = vector.load %arg2[%c2, %c0_9, %c0_10] : memref<7x45x384xf32, #tpu.memory_space<vmem>>, vector<1x45x384xf32>
    %17 = vector.shape_cast %16 : vector<1x45x384xf32> to vector<45x384xf32>
    %cst_11 = arith.constant dense<0.000000e+00> : vector<32x384xf32>
    %18 = tpu.matmul %15, %17, %cst_11 {dimension_numbers = #tpu.dot_dimension_numbers<[1], [0], [0], [1], [0, 0, 1, 1], [], []>} : vector<32x45xf32>, vector<45x384xf32>, vector<32x384xf32> -> vector<32x384xf32>
    %19 = arith.addf %13, %18 : vector<32x384xf32>
    %20 = vector.extract_strided_slice %0 {offsets = [0, 3, 0], sizes = [2, 16, 45], strides = [1, 1, 1]} : vector<2x22x45xf32> to vector<2x16x45xf32>
    %21 = vector.shape_cast %20 : vector<2x16x45xf32> to vector<32x45xf32>
    %c3 = arith.constant 3 : index
    %c0_12 = arith.constant 0 : index
    %c0_13 = arith.constant 0 : index
    %22 = vector.load %arg2[%c3, %c0_12, %c0_13] : memref<7x45x384xf32, #tpu.memory_space<vmem>>, vector<1x45x384xf32>
    %23 = vector.shape_cast %22 : vector<1x45x384xf32> to vector<45x384xf32>
    %cst_14 = arith.constant dense<0.000000e+00> : vector<32x384xf32>
    %24 = tpu.matmul %21, %23, %cst_14 {dimension_numbers = #tpu.dot_dimension_numbers<[1], [0], [0], [1], [0, 0, 1, 1], [], []>} : vector<32x45xf32>, vector<45x384xf32>, vector<32x384xf32> -> vector<32x384xf32>
    %25 = arith.addf %19, %24 : vector<32x384xf32>
    %26 = vector.extract_strided_slice %0 {offsets = [0, 4, 0], sizes = [2, 16, 45], strides = [1, 1, 1]} : vector<2x22x45xf32> to vector<2x16x45xf32>
    %27 = vector.shape_cast %26 : vector<2x16x45xf32> to vector<32x45xf32>
    %c4 = arith.constant 4 : index
    %c0_15 = arith.constant 0 : index
    %c0_16 = arith.constant 0 : index
    %28 = vector.load %arg2[%c4, %c0_15, %c0_16] : memref<7x45x384xf32, #tpu.memory_space<vmem>>, vector<1x45x384xf32>
    %29 = vector.shape_cast %28 : vector<1x45x384xf32> to vector<45x384xf32>
    %cst_17 = arith.constant dense<0.000000e+00> : vector<32x384xf32>
    %30 = tpu.matmul %27, %29, %cst_17 {dimension_numbers = #tpu.dot_dimension_numbers<[1], [0], [0], [1], [0, 0, 1, 1], [], []>} : vector<32x45xf32>, vector<45x384xf32>, vector<32x384xf32> -> vector<32x384xf32>
    %31 = arith.addf %25, %30 : vector<32x384xf32>
    %32 = vector.extract_strided_slice %0 {offsets = [0, 5, 0], sizes = [2, 16, 45], strides = [1, 1, 1]} : vector<2x22x45xf32> to vector<2x16x45xf32>
    %33 = vector.shape_cast %32 : vector<2x16x45xf32> to vector<32x45xf32>
    %c5 = arith.constant 5 : index
    %c0_18 = arith.constant 0 : index
    %c0_19 = arith.constant 0 : index
    %34 = vector.load %arg2[%c5, %c0_18, %c0_19] : memref<7x45x384xf32, #tpu.memory_space<vmem>>, vector<1x45x384xf32>
    %35 = vector.shape_cast %34 : vector<1x45x384xf32> to vector<45x384xf32>
    %cst_20 = arith.constant dense<0.000000e+00> : vector<32x384xf32>
    %36 = tpu.matmul %33, %35, %cst_20 {dimension_numbers = #tpu.dot_dimension_numbers<[1], [0], [0], [1], [0, 0, 1, 1], [], []>} : vector<32x45xf32>, vector<45x384xf32>, vector<32x384xf32> -> vector<32x384xf32>
    %37 = arith.addf %31, %36 : vector<32x384xf32>
    %38 = vector.extract_strided_slice %0 {offsets = [0, 6, 0], sizes = [2, 16, 45], strides = [1, 1, 1]} : vector<2x22x45xf32> to vector<2x16x45xf32>
    %39 = vector.shape_cast %38 : vector<2x16x45xf32> to vector<32x45xf32>
    %c6 = arith.constant 6 : index
    %c0_21 = arith.constant 0 : index
    %c0_22 = arith.constant 0 : index
    %40 = vector.load %arg2[%c6, %c0_21, %c0_22] : memref<7x45x384xf32, #tpu.memory_space<vmem>>, vector<1x45x384xf32>
    %41 = vector.shape_cast %40 : vector<1x45x384xf32> to vector<45x384xf32>
    %cst_23 = arith.constant dense<0.000000e+00> : vector<32x384xf32>
    %42 = tpu.matmul %39, %41, %cst_23 {dimension_numbers = #tpu.dot_dimension_numbers<[1], [0], [0], [1], [0, 0, 1, 1], [], []>} : vector<32x45xf32>, vector<45x384xf32>, vector<32x384xf32> -> vector<32x384xf32>
    %43 = arith.addf %37, %42 : vector<32x384xf32>
    %c0_24 = arith.constant 0 : index
    %c0_25 = arith.constant 0 : index
    %44 = vector.load %arg3[%c0_24, %c0_25] : memref<1x384xf32, #tpu.memory_space<vmem>>, vector<1x384xf32>
    %45 = vector.broadcast %44 : vector<1x384xf32> to vector<32x384xf32>
    %46 = arith.addf %43, %45 : vector<32x384xf32>
    %cst_26 = arith.constant 0.000000e+00 : f32
    %47 = vector.broadcast %cst_26 : f32 to vector<32x384xf32>
    %48 = arith.maximumf %46, %47 : vector<32x384xf32>
    %c0_27 = arith.constant 0 : index
    %c0_28 = arith.constant 0 : index
    %49 = vector.load %arg4[%c0_27, %c0_28] : memref<384x512xf32, #tpu.memory_space<vmem>>, vector<384x512xf32>
    %cst_29 = arith.constant dense<0.000000e+00> : vector<32x512xf32>
    %50 = tpu.matmul %48, %49, %cst_29 {dimension_numbers = #tpu.dot_dimension_numbers<[1], [0], [0], [1], [0, 0, 1, 1], [], []>} : vector<32x384xf32>, vector<384x512xf32>, vector<32x512xf32> -> vector<32x512xf32>
    %c0_30 = arith.constant 0 : index
    %c0_31 = arith.constant 0 : index
    %51 = vector.load %arg5[%c0_30, %c0_31] : memref<1x512xf32, #tpu.memory_space<vmem>>, vector<1x512xf32>
    %52 = vector.broadcast %51 : vector<1x512xf32> to vector<32x512xf32>
    %53 = arith.addf %50, %52 : vector<32x512xf32>
    %54 = vector.shape_cast %53 : vector<32x512xf32> to vector<2x16x512xf32>
    %c0_32 = arith.constant 0 : index
    %c0_33 = arith.constant 0 : index
    %c0_34 = arith.constant 0 : index
    %55 = vector.load %arg6[%c0_32, %c0_33, %c0_34] : memref<2x16x512xf32, #tpu.memory_space<vmem>>, vector<2x16x512xf32>
    tpu.vector_store %arg6[%c0_32, %c0_33, %c0_34], %54 {strides = array<i32>} : memref<2x16x512xf32, #tpu.memory_space<vmem>>, vector<2x16x512xf32>,
    return
  }
  func.func @transform_0(%arg0: i32) -> (i32, i32, i32) {
    %c0_i32 = arith.constant 0 : i32
    %c0_i32_0 = arith.constant 0 : i32
    %c0_i32_1 = arith.constant 0 : i32
    return %arg0, %c0_i32, %c0_i32_0 : i32, i32, i32
  }
  func.func @transform_1(%arg0: i32) -> (i32, i32, i32) {
    %c0_i32 = arith.constant 0 : i32
    %c0_i32_0 = arith.constant 0 : i32
    %c0_i32_1 = arith.constant 0 : i32
    %c0_i32_2 = arith.constant 0 : i32
    return %c0_i32, %c0_i32_0, %c0_i32_1 : i32, i32, i32
  }
  func.func @transform_2(%arg0: i32) -> (i32, i32) {
    %c0_i32 = arith.constant 0 : i32
    %c0_i32_0 = arith.constant 0 : i32
    %c0_i32_1 = arith.constant 0 : i32
    return %c0_i32, %c0_i32_0 : i32, i32
  }
  func.func @transform_3(%arg0: i32) -> (i32, i32) {
    %c0_i32 = arith.constant 0 : i32
    %c0_i32_0 = arith.constant 0 : i32
    %c0_i32_1 = arith.constant 0 : i32
    return %c0_i32, %c0_i32_0 : i32, i32
  }
  func.func @transform_4(%arg0: i32) -> (i32, i32) {
    %c0_i32 = arith.constant 0 : i32
    %c0_i32_0 = arith.constant 0 : i32
    %c0_i32_1 = arith.constant 0 : i32
    return %c0_i32, %c0_i32_0 : i32, i32
  }
  func.func @transform_5(%arg0: i32) -> (i32, i32, i32) {
    %c0_i32 = arith.constant 0 : i32
    %c0_i32_0 = arith.constant 0 : i32
    %c0_i32_1 = arith.constant 0 : i32
    return %arg0, %c0_i32, %c0_i32_0 : i32, i32, i32
  }
}

</mosaic_0001>

<llo_original>
// kernel: tpu_custom_call.1
$region0: #{tpu_custom_call.1}
  #allocation0 [shape = 'u32[]', space=smem, size = 0x4, offset = 0x4, fixed_abs, tag = 'smem constant byte address 0x4 - core index']
  #allocation1 [shape = 'u32[144,128]{1,0:T(1,128)}', space=vmem, size = 0x12000, scoped, tag = 'internal scratch']
  %s0 = inlined_call_operand.hbm [shape: f32[2,22,45], index: 0, kind: input, shape index: {}]
  %s1 = inlined_call_operand.hbm [shape: f32[7,45,384], index: 1, kind: input, shape index: {}]
  %s2 = inlined_call_operand.hbm [shape: f32[1,384], index: 2, kind: input, shape index: {}]
  %s3 = inlined_call_operand.hbm [shape: f32[384,512], index: 3, kind: input, shape index: {}]
  %s4 = inlined_call_operand.hbm [shape: f32[1,512], index: 4, kind: input, shape index: {}]
  %s5 = inlined_call_operand.hbm [shape: f32[2,16,512], index: 5, kind: output, shape index: {}]
  %s6 = sld [smem:[#allocation0]]
  $region50: #{tpu_custom_call.1} parent=0
    _
  %s8 = ssub.s32 1, %s6
  %s9 = scalar_select 0, %s8, %s6
  $region1: #{tpu_custom_call.1} parent=0
    #allocation2 [shape = 'u8[24576]{0}', space=vmem, size = 0x6000, scoped, tag = 'input window, operand 0, single buffered']
    #allocation3 [shape = 's32[1]{0}', space=sflag, size = 0x4, scoped, tag = 'scoped memory for tpu_custom_call.1']
    #allocation4 [shape = 's32[1]{0}', space=sflag, size = 0x4, scoped, tag = 'scoped memory for tpu_custom_call.1']
    #allocation5 [shape = 'u8[516096]{0}', space=vmem, size = 0x7e000, scoped, tag = 'input window, operand 1, single buffered']
    #allocation6 [shape = 's32[1]{0}', space=sflag, size = 0x4, scoped, tag = 'scoped memory for tpu_custom_call.1']
    #allocation7 [shape = 'u8[1536]{0}', space=vmem, size = 0x800, scoped, tag = 'input window, operand 2, single buffered']
    #allocation8 [shape = 'u8[786432]{0}', space=vmem, size = 0xc0000, scoped, tag = 'input window, operand 3, single buffered']
    #allocation9 [shape = 's32[1]{0}', space=sflag, size = 0x4, scoped, tag = 'scoped memory for tpu_custom_call.1']
    #allocation10 [shape = 'u8[2048]{0}', space=vmem, size = 0x800, scoped, tag = 'input window, operand 4, single buffered']
    #allocation11 [shape = 'u8[65536]{0}', space=vmem, size = 0x10000, scoped, tag = 'output window, operand 0, single buffered']
    %10 = vsyncpa [#allocation3], 0
    %11 = vsyncpa [#allocation6], 0
    %12 = vsyncpa [#allocation9], 0
    %13 = vsyncpa [#allocation4], 0
    // Predicated region
    $region2: #{tpu_custom_call.1} parent=1 // pred_check
      _
    $region3: #{tpu_custom_call.1} parent=1 // pred_check_branch
      %15 = sbr.rel (0) target = $region5
    $region4: #{tpu_custom_call.1} parent=1 // pred_region
      %s17 = ssub.s32 768, 768
      %18 = vsyncadd [#allocation3], %s17
      %s19 = sshll.u32 [#allocation2], 4
      %s20 = int_to_ptr.vmem [resolvable:$true] %s19
      %25 = dma.hbm_to_vmem [thread:$0]  %s0, 768, %s20, [#allocation3], 128, 128, 8
    $region5: #{tpu_custom_call.1} parent=1 // pred_fallthru
      _
    // Predicated region
    $region6: #{tpu_custom_call.1} parent=1 // pred_check
      _
    $region7: #{tpu_custom_call.1} parent=1 // pred_check_branch
      %27 = sbr.rel (0) target = $region9
    $region8: #{tpu_custom_call.1} parent=1 // pred_region
      %s29 = ssub.s32 16128, 16128
      %30 = vsyncadd [#allocation6], %s29
      %s31 = sshll.u32 [#allocation5], 4
      %s32 = int_to_ptr.vmem [resolvable:$true] %s31
      %37 = dma.hbm_to_vmem [thread:$0]  %s1, 16128, %s32, [#allocation6], 384, 384, 24
    $region9: #{tpu_custom_call.1} parent=1 // pred_fallthru
      _
    // Predicated region
    $region10: #{tpu_custom_call.1} parent=1 // pred_check
      _
    $region11: #{tpu_custom_call.1} parent=1 // pred_check_branch
      %39 = sbr.rel (0) target = $region13
    $region12: #{tpu_custom_call.1} parent=1 // pred_region
      %s41 = ssub.s32 48, 48
      %42 = vsyncadd [#allocation6], %s41
      %s44 = sshll.u32 [#allocation7], 4
      %s45 = int_to_ptr.vmem [resolvable:$true] %s44
      %47 = dma.hbm_to_vmem [thread:$0]  %s2, 48, %s45, [#allocation6]
    $region13: #{tpu_custom_call.1} parent=1 // pred_fallthru
      _
    // Predicated region
    $region14: #{tpu_custom_call.1} parent=1 // pred_check
      _
    $region15: #{tpu_custom_call.1} parent=1 // pred_check_branch
      %49 = sbr.rel (0) target = $region17
    $region16: #{tpu_custom_call.1} parent=1 // pred_region
      %s51 = ssub.s32 24576, 24576
      %52 = vsyncadd [#allocation9], %s51
      %s53 = sshll.u32 [#allocation8], 4
      %s54 = int_to_ptr.vmem [resolvable:$true] %s53
      %59 = dma.hbm_to_vmem [thread:$0]  %s3, 24576, %s54, [#allocation9], 512, 512, 32
    $region17: #{tpu_custom_call.1} parent=1 // pred_fallthru
      _
    // Predicated region
    $region18: #{tpu_custom_call.1} parent=1 // pred_check
      _
    $region19: #{tpu_custom_call.1} parent=1 // pred_check_branch
      %61 = sbr.rel (0) target = $region21
    $region20: #{tpu_custom_call.1} parent=1 // pred_region
      %s63 = ssub.s32 64, 64
      %64 = vsyncadd [#allocation9], %s63
      %s66 = sshll.u32 [#allocation10], 4
      %s67 = int_to_ptr.vmem [resolvable:$true] %s66
      %69 = dma.hbm_to_vmem [thread:$0]  %s4, 64, %s67, [#allocation9]
    $region21: #{tpu_custom_call.1} parent=1 // pred_fallthru
      _
    // Predicated region
    $region22: #{tpu_custom_call.1} parent=1 // pred_check
      _
    $region23: #{tpu_custom_call.1} parent=1 // pred_check_branch
      %71 = sbr.rel (0) target = $region25
    $region24: #{tpu_custom_call.1} parent=1 // pred_region
      %72 = dma.done [#allocation3], 768
    $region25: #{tpu_custom_call.1} parent=1 // pred_fallthru
      _
    // Predicated region
    $region26: #{tpu_custom_call.1} parent=1 // pred_check
      _
    $region27: #{tpu_custom_call.1} parent=1 // pred_check_branch
      %74 = sbr.rel (0) target = $region29
    $region28: #{tpu_custom_call.1} parent=1 // pred_region
      %75 = dma.done [#allocation6], 16128
    $region29: #{tpu_custom_call.1} parent=1 // pred_fallthru
      _
    // Predicated region
    $region30: #{tpu_custom_call.1} parent=1 // pred_check
      _
    $region31: #{tpu_custom_call.1} parent=1 // pred_check_branch
      %77 = sbr.rel (0) target = $region33
    $region32: #{tpu_custom_call.1} parent=1 // pred_region
      %78 = dma.done [#allocation6], 48
    $region33: #{tpu_custom_call.1} parent=1 // pred_fallthru
      _
    // Predicated region
    $region34: #{tpu_custom_call.1} parent=1 // pred_check
      _
    $region35: #{tpu_custom_call.1} parent=1 // pred_check_branch
      %80 = sbr.rel (0) target = $region37
    $region36: #{tpu_custom_call.1} parent=1 // pred_region
      %81 = dma.done [#allocation9], 24576
    $region37: #{tpu_custom_call.1} parent=1 // pred_fallthru
      _
    // Predicated region
    $region38: #{tpu_custom_call.1} parent=1 // pred_check
      _
    $region39: #{tpu_custom_call.1} parent=1 // pred_check_branch
      %83 = sbr.rel (0) target = $region41
    $region40: #{tpu_custom_call.1} parent=1 // pred_region
      %84 = dma.done [#allocation9], 64
    $region41: #{tpu_custom_call.1} parent=1 // pred_fallthru
      _
    %v85 = vld [vmem:[#allocation2] sm:$0xff]
    %v86 = vld [vmem:[#allocation2 + $0x8] sm:$0xff]
    %v87 = vld [vmem:[#allocation2 + $0x10] sm:$0x3f]
    %v88 = vld [vmem:[#allocation2 + $0x18] sm:$0xff]
    %v89 = vld [vmem:[#allocation2 + $0x20] sm:$0xff]
    %v90 = vld [vmem:[#allocation2 + $0x28] sm:$0x3f]
    %v91 = vld [vmem:[#allocation5] sm:$0xff]
    %v92 = vld [vmem:[#allocation5 + $0x8] sm:$0xff]
    %v93 = vld [vmem:[#allocation5 + $0x10] sm:$0xff]
    %v94 = vld [vmem:[#allocation5 + $0x18] sm:$0xff]
    %v95 = vld [vmem:[#allocation5 + $0x20] sm:$0xff]
    %v96 = vld [vmem:[#allocation5 + $0x28] sm:$0xff]
    %v97 = vld [vmem:[#allocation5 + $0x30] sm:$0xff]
    %v98 = vld [vmem:[#allocation5 + $0x38] sm:$0xff]
    %v99 = vld [vmem:[#allocation5 + $0x40] sm:$0xff]
    %v100 = vld [vmem:[#allocation5 + $0x48] sm:$0xff]
    %v101 = vld [vmem:[#allocation5 + $0x50] sm:$0xff]
    %v102 = vld [vmem:[#allocation5 + $0x58] sm:$0xff]
    %v103 = vld [vmem:[#allocation5 + $0x60] sm:$0xff]
    %v104 = vld [vmem:[#allocation5 + $0x68] sm:$0xff]
    %v105 = vld [vmem:[#allocation5 + $0x70] sm:$0xff]
    %v106 = vld [vmem:[#allocation5 + $0x78] sm:$0x1f]
    %v107 = vld [vmem:[#allocation5 + $0x80] sm:$0x1f]
    %v108 = vld [vmem:[#allocation5 + $0x88] sm:$0x1f]
    %vm115 = vcmask 1046528
    %v116 = vrot.slane %v85, 1
    %v117 = vrot.slane %v86, 1
    %v118 = vsel %vm115, %v116, %v117
    %v119 = vrot.slane %v87, 1
    %v120 = vsel %vm115, %v117, %v119
    %v121 = vrot.slane %v88, 1
    %v122 = vrot.slane %v89, 1
    %v123 = vsel %vm115, %v121, %v122
    %v124 = vrot.slane %v90, 1
    %v125 = vsel %vm115, %v122, %v124
    %s126 = scalar_lea.vmem [#allocation5], 144
    %v127 = vld [vmem:[%s126] sm:$0xff]
    %v128 = vld [vmem:[%s126 + $0x8] sm:$0xff]
    %v129 = vld [vmem:[%s126 + $0x10] sm:$0xff]
    %v130 = vld [vmem:[%s126 + $0x18] sm:$0xff]
    %v131 = vld [vmem:[%s126 + $0x20] sm:$0xff]
    %v132 = vld [vmem:[%s126 + $0x28] sm:$0xff]
    %v133 = vld [vmem:[%s126 + $0x30] sm:$0xff]
    %v134 = vld [vmem:[%s126 + $0x38] sm:$0xff]
    %v135 = vld [vmem:[%s126 + $0x40] sm:$0xff]
    %v136 = vld [vmem:[%s126 + $0x48] sm:$0xff]
    %v137 = vld [vmem:[%s126 + $0x50] sm:$0xff]
    %v138 = vld [vmem:[%s126 + $0x58] sm:$0xff]
    %v139 = vld [vmem:[%s126 + $0x60] sm:$0xff]
    %v140 = vld [vmem:[%s126 + $0x68] sm:$0xff]
    %v141 = vld [vmem:[%s126 + $0x70] sm:$0xff]
    %v142 = vld [vmem:[%s126 + $0x78] sm:$0x1f]
    %v143 = vld [vmem:[%s126 + $0x80] sm:$0x1f]
    %v144 = vld [vmem:[%s126 + $0x88] sm:$0x1f]
    %vm145 = vcmask 367616
    %v146 = vsel %vm145, %v118, 0
    %v148 = vsel %vm145, %v120, 0
    %v150 = vsel %vm145, %v123, 0
    %v152 = vsel %vm145, %v125, 0
    %vm154 = vcmask 1044480
    %v156 = vsel %vm154, %v142, 0
    %v159 = vsel %vm154, %v143, 0
    %v162 = vsel %vm154, %v144, 0
    %164 = vmatprep.subr.mxu0 %v128
    %165 = vmatpush1.msra.mxu0 %v127
    %166 = vmatprep.subr.mxu0 %v131
    %167 = vmatpush1.msra.mxu0 %v130
    %168 = vmatprep.subr.mxu0 %v134
    %169 = vmatpush1.msra.mxu0 %v133
    %170 = vmatprep.subr.mxu0 %v137
    %171 = vmatpush1.msra.mxu0 %v136
    %172 = vmatprep.subr.mxu0 %v140
    %173 = vmatpush1.msra.mxu0 %v139
    %174 = vmatprep.subr.mxu0 %v159
    %175 = vmatpush1.msra.mxu0 %v156
    %176 = vmatprep.subr.mxu0 0.0
    %177 = vmatpush1.msra.mxu0 0.0
    %178 = vmatprep.subr.mxu0 0.0
    %179 = vmatpush1.msra.mxu0 0.0
    %180 = vmatprep.subr.mxu0 0.0
    %181 = vmatpush1.msra.mxu0 0.0
    %182 = vmatprep.subr.mxu0 0.0
    %183 = vmatpush1.msra.mxu0 0.0
    %184 = vmatprep.subr.mxu0 0.0
    %185 = vmatpush1.msra.mxu0 0.0
    %186 = vmatprep.subr.mxu0 0.0
    %187 = vmatpush1.msra.mxu0 0.0
    %188 = vmatprep.subr.mxu0 0.0
    %189 = vmatpush1.msra.mxu0 0.0
    %190 = vmatprep.subr.mxu0 0.0
    %191 = vmatpush1.msra.mxu0 0.0
    %192 = vmatprep.subr.mxu0 0.0
    %193 = vmatpush1.msra.mxu0 0.0
    %194 = vmatprep.subr.mxu0 0.0
    %195 = vmatpush1.msra.mxu0 0.0
    %196 = vmatprep.subr.mxu0 0.0
    %197 = vmatpush1.msra.mxu0 0.0
    %198 = vmatprep.subr.mxu0 0.0
    %199 = vmatpush1.msra.mxu0 0.0
    %200 = vmatprep.subr.mxu0 0.0
    %201 = vmatpush1.msra.mxu0 0.0
    %202 = vmatprep.subr.mxu0 0.0
    %203 = vmatpush1.msra.mxu0 0.0
    %204 = vmatprep.subr.mxu0 0.0
    %205 = vmatpush1.msra.mxu0 0.0
    %206 = vmatprep.subr.mxu0 0.0
    %207 = vmatpush1.msra.mxu0 0.0
    %208 = vmatprep.subr.mxu0 0.0
    %209 = vmatpush1.msra.mxu0 0.0
    %210 = vmatprep.subr.mxu0 0.0
    %211 = vmatpush1.msra.mxu0 0.0
    %212 = vmatprep.subr.mxu0 0.0
    %213 = vmatpush1.msra.mxu0 0.0
    %214 = vmatprep.subr.mxu0 0.0
    %215 = vmatpush1.msra.mxu0 0.0
    %216 = vmatprep.subr.mxu0 0.0
    %217 = vmatpush1.msra.mxu0 0.0
    %218 = vmatprep.subr.mxu0 0.0
    %219 = vmatpush1.msra.mxu0 0.0
    %220 = vmatprep.subr.mxu0 0.0
    %221 = vmatpush1.msra.mxu0 0.0
    %222 = vmatprep.subr.mxu0 0.0
    %223 = vmatpush1.msra.mxu0 0.0
    %224 = vmatprep.subr.mxu0 0.0
    %225 = vmatpush1.msra.mxu0 0.0
    %226 = vmatprep.subr.mxu0 0.0
    %227 = vmatpush1.msra.mxu0 0.0
    %228 = vmatprep.mubr.f32.mxu0 0.0
    %229 = vmatmul.mubr.f32.gmra.mrb[0].mxu0 %v146
    %v230 = vpop.f32.mrb[0].mxu0
    %v231 = vadd.f32 0.0, %v230
    %v232 = vpop.f32.mrb[0].mxu0
    %v233 = vadd.f32 0.0, %v232
    %234 = vmatprep.mubr.f32.mxu0 0.0
    %235 = vmatmul.mubr.f32.gmra.mrb[0].mxu0 %v148
    %v236 = vpop.f32.mrb[0].mxu0
    %v237 = vadd.f32 0.0, %v236
    %v238 = vpop.f32.mrb[0].mxu0
    %v239 = vadd.f32 0.0, %v238
    %240 = vmatprep.mubr.f32.mxu0 0.0
    %241 = vmatmul.mubr.f32.gmra.mrb[0].mxu0 %v150
    %v242 = vpop.f32.mrb[0].mxu0
    %v243 = vadd.f32 0.0, %v242
    %v244 = vpop.f32.mrb[0].mxu0
    %v245 = vadd.f32 0.0, %v244
    %246 = vmatprep.mubr.f32.mxu0 0.0
    %247 = vmatmul.mubr.f32.gmra.mrb[0].mxu0 %v152
    %v248 = vpop.f32.mrb[0].mxu0
    %v249 = vadd.f32 0.0, %v248
    %v250 = vpop.f32.mrb[0].mxu0
    %v251 = vadd.f32 0.0, %v250
    %252 = vdwg.mxu0
    %253 = vmatprep.subr.mxu0 0.0
    %254 = vmatpush1.msra.mxu0 %v129
    %255 = vmatprep.subr.mxu0 0.0
    %256 = vmatpush1.msra.mxu0 %v132
    %257 = vmatprep.subr.mxu0 0.0
    %258 = vmatpush1.msra.mxu0 %v135
    %259 = vmatprep.subr.mxu0 0.0
    %260 = vmatpush1.msra.mxu0 %v138
    %261 = vmatprep.subr.mxu0 0.0
    %262 = vmatpush1.msra.mxu0 %v141
    %263 = vmatprep.subr.mxu0 0.0
    %264 = vmatpush1.msra.mxu0 %v162
    %265 = vmatprep.subr.mxu0 0.0
    %266 = vmatpush1.msra.mxu0 0.0
    %267 = vmatprep.subr.mxu0 0.0
    %268 = vmatpush1.msra.mxu0 0.0
    %269 = vmatprep.subr.mxu0 0.0
    %270 = vmatpush1.msra.mxu0 0.0
    %271 = vmatprep.subr.mxu0 0.0
    %272 = vmatpush1.msra.mxu0 0.0
    %273 = vmatprep.subr.mxu0 0.0
    %274 = vmatpush1.msra.mxu0 0.0
    %275 = vmatprep.subr.mxu0 0.0
    %276 = vmatpush1.msra.mxu0 0.0
    %277 = vmatprep.subr.mxu0 0.0
    %278 = vmatpush1.msra.mxu0 0.0
    %279 = vmatprep.subr.mxu0 0.0
    %280 = vmatpush1.msra.mxu0 0.0
    %281 = vmatprep.subr.mxu0 0.0
    %282 = vmatpush1.msra.mxu0 0.0
    %283 = vmatprep.subr.mxu0 0.0
    %284 = vmatpush1.msra.mxu0 0.0
    %285 = vmatprep.subr.mxu0 0.0
    %286 = vmatpush1.msra.mxu0 0.0
    %287 = vmatprep.subr.mxu0 0.0
    %288 = vmatpush1.msra.mxu0 0.0
    %289 = vmatprep.subr.mxu0 0.0
    %290 = vmatpush1.msra.mxu0 0.0
    %291 = vmatprep.subr.mxu0 0.0
    %292 = vmatpush1.msra.mxu0 0.0
    %293 = vmatprep.subr.mxu0 0.0
    %294 = vmatpush1.msra.mxu0 0.0
    %295 = vmatprep.subr.mxu0 0.0
    %296 = vmatpush1.msra.mxu0 0.0
    %297 = vmatprep.subr.mxu0 0.0
    %298 = vmatpush1.msra.mxu0 0.0
    %299 = vmatprep.subr.mxu0 0.0
    %300 = vmatpush1.msra.mxu0 0.0
    %301 = vmatprep.subr.mxu0 0.0
    %302 = vmatpush1.msra.mxu0 0.0
    %303 = vmatprep.subr.mxu0 0.0
    %304 = vmatpush1.msra.mxu0 0.0
    %305 = vmatprep.subr.mxu0 0.0
    %306 = vmatpush1.msra.mxu0 0.0
    %307 = vmatprep.subr.mxu0 0.0
    %308 = vmatpush1.msra.mxu0 0.0
    %309 = vmatprep.subr.mxu0 0.0
    %310 = vmatpush1.msra.mxu0 0.0
    %311 = vmatprep.subr.mxu0 0.0
    %312 = vmatpush1.msra.mxu0 0.0
    %313 = vmatprep.subr.mxu0 0.0
    %314 = vmatpush1.msra.mxu0 0.0
    %315 = vmatprep.subr.mxu0 0.0
    %316 = vmatpush1.msra.mxu0 0.0
    %317 = vmatprep.mubr.f32.mxu0 0.0
    %318 = vmatmul.mubr.f32.gmra.mrb[0].mxu0 %v146
    %v319 = vpop.f32.mrb[0].mxu0
    %v320 = vadd.f32 0.0, %v319
    %v321 = vpop.f32.mrb[0].mxu0
    %322 = vmatprep.mubr.f32.mxu0 0.0
    %323 = vmatmul.mubr.f32.gmra.mrb[0].mxu0 %v148
    %v324 = vpop.f32.mrb[0].mxu0
    %v325 = vadd.f32 0.0, %v324
    %v326 = vpop.f32.mrb[0].mxu0
    %327 = vmatprep.mubr.f32.mxu0 0.0
    %328 = vmatmul.mubr.f32.gmra.mrb[0].mxu0 %v150
    %v329 = vpop.f32.mrb[0].mxu0
    %v330 = vadd.f32 0.0, %v329
    %v331 = vpop.f32.mrb[0].mxu0
    %332 = vmatprep.mubr.f32.mxu0 0.0
    %333 = vmatmul.mubr.f32.gmra.mrb[0].mxu0 %v152
    %v334 = vpop.f32.mrb[0].mxu0
    %v335 = vadd.f32 0.0, %v334
    %v336 = vpop.f32.mrb[0].mxu0
    %337 = vdwg.mxu0
    %v338 = vsel %vm145, %v85, 0
    %v340 = vsel %vm145, %v86, 0
    %v342 = vsel %vm145, %v88, 0
    %v344 = vsel %vm145, %v89, 0
    %v347 = vsel %vm154, %v106, 0
    %v350 = vsel %vm154, %v107, 0
    %v353 = vsel %vm154, %v108, 0
    %355 = vmatprep.subr.mxu0 %v92
    %356 = vmatpush1.msra.mxu0 %v91
    %357 = vmatprep.subr.mxu0 %v95
    %358 = vmatpush1.msra.mxu0 %v94
    %359 = vmatprep.subr.mxu0 %v98
    %360 = vmatpush1.msra.mxu0 %v97
    %361 = vmatprep.subr.mxu0 %v101
    %362 = vmatpush1.msra.mxu0 %v100
    %363 = vmatprep.subr.mxu0 %v104
    %364 = vmatpush1.msra.mxu0 %v103
    %365 = vmatprep.subr.mxu0 %v350
    %366 = vmatpush1.msra.mxu0 %v347
    %367 = vmatprep.subr.mxu0 0.0
    %368 = vmatpush1.msra.mxu0 0.0
    %369 = vmatprep.subr.mxu0 0.0
    %370 = vmatpush1.msra.mxu0 0.0
    %371 = vmatprep.subr.mxu0 0.0
    %372 = vmatpush1.msra.mxu0 0.0
    %373 = vmatprep.subr.mxu0 0.0
    %374 = vmatpush1.msra.mxu0 0.0
    %375 = vmatprep.subr.mxu0 0.0
    %376 = vmatpush1.msra.mxu0 0.0
    %377 = vmatprep.subr.mxu0 0.0
    %378 = vmatpush1.msra.mxu0 0.0
    %379 = vmatprep.subr.mxu0 0.0
    %380 = vmatpush1.msra.mxu0 0.0
    %381 = vmatprep.subr.mxu0 0.0
    %382 = vmatpush1.msra.mxu0 0.0
    %383 = vmatprep.subr.mxu0 0.0
    %384 = vmatpush1.msra.mxu0 0.0
    %385 = vmatprep.subr.mxu0 0.0
    %386 = vmatpush1.msra.mxu0 0.0
    %387 = vmatprep.subr.mxu0 0.0
    %388 = vmatpush1.msra.mxu0 0.0
    %389 = vmatprep.subr.mxu0 0.0
    %390 = vmatpush1.msra.mxu0 0.0
    %391 = vmatprep.subr.mxu0 0.0
    %392 = vmatpush1.msra.mxu0 0.0
    %393 = vmatprep.subr.mxu0 0.0
    %394 = vmatpush1.msra.mxu0 0.0
    %395 = vmatprep.subr.mxu0 0.0
    %396 = vmatpush1.msra.mxu0 0.0
    %397 = vmatprep.subr.mxu0 0.0
    %398 = vmatpush1.msra.mxu0 0.0
    %399 = vmatprep.subr.mxu0 0.0
    %400 = vmatpush1.msra.mxu0 0.0
    %401 = vmatprep.subr.mxu0 0.0
    %402 = vmatpush1.msra.mxu0 0.0
    %403 = vmatprep.subr.mxu0 0.0
    %404 = vmatpush1.msra.mxu0 0.0
    %405 = vmatprep.subr.mxu0 0.0
    %406 = vmatpush1.msra.mxu0 0.0
    %407 = vmatprep.subr.mxu0 0.0
    %408 = vmatpush1.msra.mxu0 0.0
    %409 = vmatprep.subr.mxu0 0.0
    %410 = vmatpush1.msra.mxu0 0.0
    %411 = vmatprep.subr.mxu0 0.0
    %412 = vmatpush1.msra.mxu0 0.0
    %413 = vmatprep.subr.mxu0 0.0
    %414 = vmatpush1.msra.mxu0 0.0
    %415 = vmatprep.subr.mxu0 0.0
    %416 = vmatpush1.msra.mxu0 0.0
    %417 = vmatprep.subr.mxu0 0.0
    %418 = vmatpush1.msra.mxu0 0.0
    %419 = vmatprep.mubr.f32.mxu0 0.0
    %420 = vmatmul.mubr.f32.gmra.mrb[0].mxu0 %v338
    %v421 = vpop.f32.mrb[0].mxu0
    %v422 = vadd.f32 %v231, %v421
    %v423 = vpop.f32.mrb[0].mxu0
    %v424 = vadd.f32 %v233, %v423
    %425 = vmatprep.mubr.f32.mxu0 0.0
    %426 = vmatmul.mubr.f32.gmra.mrb[0].mxu0 %v340
    %v427 = vpop.f32.mrb[0].mxu0
    %v428 = vadd.f32 %v237, %v427
    %v429 = vpop.f32.mrb[0].mxu0
    %v430 = vadd.f32 %v239, %v429
    %431 = vmatprep.mubr.f32.mxu0 0.0
    %432 = vmatmul.mubr.f32.gmra.mrb[0].mxu0 %v342
    %v433 = vpop.f32.mrb[0].mxu0
    %v434 = vadd.f32 %v243, %v433
    %v435 = vpop.f32.mrb[0].mxu0
    %v436 = vadd.f32 %v245, %v435
    %437 = vmatprep.mubr.f32.mxu0 0.0
    %438 = vmatmul.mubr.f32.gmra.mrb[0].mxu0 %v344
    %v439 = vpop.f32.mrb[0].mxu0
    %v440 = vadd.f32 %v249, %v439
    %v441 = vpop.f32.mrb[0].mxu0
    %v442 = vadd.f32 %v251, %v441
    %443 = vdwg.mxu0
    %444 = vmatprep.subr.mxu0 0.0
    %445 = vmatpush1.msra.mxu0 %v93
    %446 = vmatprep.subr.mxu0 0.0
    %447 = vmatpush1.msra.mxu0 %v96
    %448 = vmatprep.subr.mxu0 0.0
    %449 = vmatpush1.msra.mxu0 %v99
    %450 = vmatprep.subr.mxu0 0.0
    %451 = vmatpush1.msra.mxu0 %v102
    %452 = vmatprep.subr.mxu0 0.0
    %453 = vmatpush1.msra.mxu0 %v105
    %454 = vmatprep.subr.mxu0 0.0
    %455 = vmatpush1.msra.mxu0 %v353
    %456 = vmatprep.subr.mxu0 0.0
    %457 = vmatpush1.msra.mxu0 0.0
    %458 = vmatprep.subr.mxu0 0.0
    %459 = vmatpush1.msra.mxu0 0.0
    %460 = vmatprep.subr.mxu0 0.0
    %461 = vmatpush1.msra.mxu0 0.0
    %462 = vmatprep.subr.mxu0 0.0
    %463 = vmatpush1.msra.mxu0 0.0
    %464 = vmatprep.subr.mxu0 0.0
    %465 = vmatpush1.msra.mxu0 0.0
    %466 = vmatprep.subr.mxu0 0.0
    %467 = vmatpush1.msra.mxu0 0.0
    %468 = vmatprep.subr.mxu0 0.0
    %469 = vmatpush1.msra.mxu0 0.0
    %470 = vmatprep.subr.mxu0 0.0
    %471 = vmatpush1.msra.mxu0 0.0
    %472 = vmatprep.subr.mxu0 0.0
    %473 = vmatpush1.msra.mxu0 0.0
    %474 = vmatprep.subr.mxu0 0.0
    %475 = vmatpush1.msra.mxu0 0.0
    %476 = vmatprep.subr.mxu0 0.0
    %477 = vmatpush1.msra.mxu0 0.0
    %478 = vmatprep.subr.mxu0 0.0
    %479 = vmatpush1.msra.mxu0 0.0
    %480 = vmatprep.subr.mxu0 0.0
    %481 = vmatpush1.msra.mxu0 0.0
    %482 = vmatprep.subr.mxu0 0.0
    %483 = vmatpush1.msra.mxu0 0.0
    %484 = vmatprep.subr.mxu0 0.0
    %485 = vmatpush1.msra.mxu0 0.0
    %486 = vmatprep.subr.mxu0 0.0
    %487 = vmatpush1.msra.mxu0 0.0
    %488 = vmatprep.subr.mxu0 0.0
    %489 = vmatpush1.msra.mxu0 0.0
    %490 = vmatprep.subr.mxu0 0.0
    %491 = vmatpush1.msra.mxu0 0.0
    %492 = vmatprep.subr.mxu0 0.0
    %493 = vmatpush1.msra.mxu0 0.0
    %494 = vmatprep.subr.mxu0 0.0
    %495 = vmatpush1.msra.mxu0 0.0
    %496 = vmatprep.subr.mxu0 0.0
    %497 = vmatpush1.msra.mxu0 0.0
    %498 = vmatprep.subr.mxu0 0.0
    %499 = vmatpush1.msra.mxu0 0.0
    %500 = vmatprep.subr.mxu0 0.0
    %501 = vmatpush1.msra.mxu0 0.0
    %502 = vmatprep.subr.mxu0 0.0
    %503 = vmatpush1.msra.mxu0 0.0
    %504 = vmatprep.subr.mxu0 0.0
    %505 = vmatpush1.msra.mxu0 0.0
    %506 = vmatprep.subr.mxu0 0.0
    %507 = vmatpush1.msra.mxu0 0.0
    %508 = vmatprep.mubr.f32.mxu0 0.0
    %509 = vmatmul.mubr.f32.gmra.mrb[0].mxu0 %v338
    %v510 = vpop.f32.mrb[0].mxu0
    %v511 = vadd.f32 %v320, %v510
    %v512 = vpop.f32.mrb[0].mxu0
    %513 = vmatprep.mubr.f32.mxu0 0.0
    %514 = vmatmul.mubr.f32.gmra.mrb[0].mxu0 %v340
    %v515 = vpop.f32.mrb[0].mxu0
    %v516 = vadd.f32 %v325, %v515
    %v517 = vpop.f32.mrb[0].mxu0
    %518 = vmatprep.mubr.f32.mxu0 0.0
    %519 = vmatmul.mubr.f32.gmra.mrb[0].mxu0 %v342
    %v520 = vpop.f32.mrb[0].mxu0
    %v521 = vadd.f32 %v330, %v520
    %v522 = vpop.f32.mrb[0].mxu0
    %523 = vmatprep.mubr.f32.mxu0 0.0
    %524 = vmatmul.mubr.f32.gmra.mrb[0].mxu0 %v344
    %v525 = vpop.f32.mrb[0].mxu0
    %v526 = vadd.f32 %v335, %v525
    %v527 = vpop.f32.mrb[0].mxu0
    %528 = vdwg.mxu0
    %vm529 = vcmask 1045504
    %v530 = vrot.slane %v85, 2
    %v531 = vrot.slane %v86, 2
    %v532 = vsel %vm529, %v530, %v531
    %v533 = vrot.slane %v87, 2
    %v534 = vsel %vm529, %v531, %v533
    %v535 = vrot.slane %v88, 2
    %v536 = vrot.slane %v89, 2
    %v537 = vsel %vm529, %v535, %v536
    %v538 = vrot.slane %v90, 2
    %v539 = vsel %vm529, %v536, %v538
    %s540 = scalar_lea.vmem [#allocation5], 288
    %v541 = vld [vmem:[%s540] sm:$0xff]
    %v542 = vld [vmem:[%s540 + $0x8] sm:$0xff]
    %v543 = vld [vmem:[%s540 + $0x10] sm:$0xff]
    %v544 = vld [vmem:[%s540 + $0x18] sm:$0xff]
    %v545 = vld [vmem:[%s540 + $0x20] sm:$0xff]
    %v546 = vld [vmem:[%s540 + $0x28] sm:$0xff]
    %v547 = vld [vmem:[%s540 + $0x30] sm:$0xff]
    %v548 = vld [vmem:[%s540 + $0x38] sm:$0xff]
    %v549 = vld [vmem:[%s540 + $0x40] sm:$0xff]
    %v550 = vld [vmem:[%s540 + $0x48] sm:$0xff]
    %v551 = vld [vmem:[%s540 + $0x50] sm:$0xff]
    %v552 = vld [vmem:[%s540 + $0x58] sm:$0xff]
    %v553 = vld [vmem:[%s540 + $0x60] sm:$0xff]
    %v554 = vld [vmem:[%s540 + $0x68] sm:$0xff]
    %v555 = vld [vmem:[%s540 + $0x70] sm:$0xff]
    %v556 = vld [vmem:[%s540 + $0x78] sm:$0x1f]
    %v557 = vld [vmem:[%s540 + $0x80] sm:$0x1f]
    %v558 = vld [vmem:[%s540 + $0x88] sm:$0x1f]
    %v559 = vsel %vm145, %v532, 0
    %v561 = vsel %vm145, %v534, 0
    %v563 = vsel %vm145, %v537, 0
    %v565 = vsel %vm145, %v539, 0
    %v568 = vsel %vm154, %v556, 0
    %v571 = vsel %vm154, %v557, 0
    %v574 = vsel %vm154, %v558, 0
    %576 = vmatprep.subr.mxu0 %v542
    %577 = vmatpush1.msra.mxu0 %v541
    %578 = vmatprep.subr.mxu0 %v545
    %579 = vmatpush1.msra.mxu0 %v544
    %580 = vmatprep.subr.mxu0 %v548
    %581 = vmatpush1.msra.mxu0 %v547
    %582 = vmatprep.subr.mxu0 %v551
    %583 = vmatpush1.msra.mxu0 %v550
    %584 = vmatprep.subr.mxu0 %v554
    %585 = vmatpush1.msra.mxu0 %v553
    %586 = vmatprep.subr.mxu0 %v571
    %587 = vmatpush1.msra.mxu0 %v568
    %588 = vmatprep.subr.mxu0 0.0
    %589 = vmatpush1.msra.mxu0 0.0
    %590 = vmatprep.subr.mxu0 0.0
    %591 = vmatpush1.msra.mxu0 0.0
    %592 = vmatprep.subr.mxu0 0.0
    %593 = vmatpush1.msra.mxu0 0.0
    %594 = vmatprep.subr.mxu0 0.0
    %595 = vmatpush1.msra.mxu0 0.0
    %596 = vmatprep.subr.mxu0 0.0
    %597 = vmatpush1.msra.mxu0 0.0
    %598 = vmatprep.subr.mxu0 0.0
    %599 = vmatpush1.msra.mxu0 0.0
    %600 = vmatprep.subr.mxu0 0.0
    %601 = vmatpush1.msra.mxu0 0.0
    %602 = vmatprep.subr.mxu0 0.0
    %603 = vmatpush1.msra.mxu0 0.0
    %604 = vmatprep.subr.mxu0 0.0
    %605 = vmatpush1.msra.mxu0 0.0
    %606 = vmatprep.subr.mxu0 0.0
    %607 = vmatpush1.msra.mxu0 0.0
    %608 = vmatprep.subr.mxu0 0.0
    %609 = vmatpush1.msra.mxu0 0.0
    %610 = vmatprep.subr.mxu0 0.0
    %611 = vmatpush1.msra.mxu0 0.0
    %612 = vmatprep.subr.mxu0 0.0
    %613 = vmatpush1.msra.mxu0 0.0
    %614 = vmatprep.subr.mxu0 0.0
    %615 = vmatpush1.msra.mxu0 0.0
    %616 = vmatprep.subr.mxu0 0.0
    %617 = vmatpush1.msra.mxu0 0.0
    %618 = vmatprep.subr.mxu0 0.0
    %619 = vmatpush1.msra.mxu0 0.0
    %620 = vmatprep.subr.mxu0 0.0
    %621 = vmatpush1.msra.mxu0 0.0
    %622 = vmatprep.subr.mxu0 0.0
    %623 = vmatpush1.msra.mxu0 0.0
    %624 = vmatprep.subr.mxu0 0.0
    %625 = vmatpush1.msra.mxu0 0.0
    %626 = vmatprep.subr.mxu0 0.0
    %627 = vmatpush1.msra.mxu0 0.0
    %628 = vmatprep.subr.mxu0 0.0
    %629 = vmatpush1.msra.mxu0 0.0
    %630 = vmatprep.subr.mxu0 0.0
    %631 = vmatpush1.msra.mxu0 0.0
    %632 = vmatprep.subr.mxu0 0.0
    %633 = vmatpush1.msra.mxu0 0.0
    %634 = vmatprep.subr.mxu0 0.0
    %635 = vmatpush1.msra.mxu0 0.0
    %636 = vmatprep.subr.mxu0 0.0
    %637 = vmatpush1.msra.mxu0 0.0
    %638 = vmatprep.subr.mxu0 0.0
    %639 = vmatpush1.msra.mxu0 0.0
    %640 = vmatprep.mubr.f32.mxu0 0.0
    %641 = vmatmul.mubr.f32.gmra.mrb[0].mxu0 %v559
    %v642 = vpop.f32.mrb[0].mxu0
    %v643 = vadd.f32 0.0, %v642
    %v644 = vpop.f32.mrb[0].mxu0
    %v645 = vadd.f32 0.0, %v644
    %646 = vmatprep.mubr.f32.mxu0 0.0
    %647 = vmatmul.mubr.f32.gmra.mrb[0].mxu0 %v561
    %v648 = vpop.f32.mrb[0].mxu0
    %v649 = vadd.f32 0.0, %v648
    %v650 = vpop.f32.mrb[0].mxu0
    %v651 = vadd.f32 0.0, %v650
    %652 = vmatprep.mubr.f32.mxu0 0.0
    %653 = vmatmul.mubr.f32.gmra.mrb[0].mxu0 %v563
    %v654 = vpop.f32.mrb[0].mxu0
    %v655 = vadd.f32 0.0, %v654
    %v656 = vpop.f32.mrb[0].mxu0
    %v657 = vadd.f32 0.0, %v656
    %658 = vmatprep.mubr.f32.mxu0 0.0
    %659 = vmatmul.mubr.f32.gmra.mrb[0].mxu0 %v565
    %v660 = vpop.f32.mrb[0].mxu0
    %v661 = vadd.f32 0.0, %v660
    %v662 = vpop.f32.mrb[0].mxu0
    %v663 = vadd.f32 0.0, %v662
    %664 = vdwg.mxu0
    %665 = vmatprep.subr.mxu0 0.0
    %666 = vmatpush1.msra.mxu0 %v543
    %667 = vmatprep.subr.mxu0 0.0
    %668 = vmatpush1.msra.mxu0 %v546
    %669 = vmatprep.subr.mxu0 0.0
    %670 = vmatpush1.msra.mxu0 %v549
    %671 = vmatprep.subr.mxu0 0.0
    %672 = vmatpush1.msra.mxu0 %v552
    %673 = vmatprep.subr.mxu0 0.0
    %674 = vmatpush1.msra.mxu0 %v555
    %675 = vmatprep.subr.mxu0 0.0
    %676 = vmatpush1.msra.mxu0 %v574
    %677 = vmatprep.subr.mxu0 0.0
    %678 = vmatpush1.msra.mxu0 0.0
    %679 = vmatprep.subr.mxu0 0.0
    %680 = vmatpush1.msra.mxu0 0.0
    %681 = vmatprep.subr.mxu0 0.0
    %682 = vmatpush1.msra.mxu0 0.0
    %683 = vmatprep.subr.mxu0 0.0
    %684 = vmatpush1.msra.mxu0 0.0
    %685 = vmatprep.subr.mxu0 0.0
    %686 = vmatpush1.msra.mxu0 0.0
    %687 = vmatprep.subr.mxu0 0.0
    %688 = vmatpush1.msra.mxu0 0.0
    %689 = vmatprep.subr.mxu0 0.0
    %690 = vmatpush1.msra.mxu0 0.0
    %691 = vmatprep.subr.mxu0 0.0
    %692 = vmatpush1.msra.mxu0 0.0
    %693 = vmatprep.subr.mxu0 0.0
    %694 = vmatpush1.msra.mxu0 0.0
    %695 = vmatprep.subr.mxu0 0.0
    %696 = vmatpush1.msra.mxu0 0.0
    %697 = vmatprep.subr.mxu0 0.0
    %698 = vmatpush1.msra.mxu0 0.0
    %699 = vmatprep.subr.mxu0 0.0
    %700 = vmatpush1.msra.mxu0 0.0
    %701 = vmatprep.subr.mxu0 0.0
    %702 = vmatpush1.msra.mxu0 0.0
    %703 = vmatprep.subr.mxu0 0.0
    %704 = vmatpush1.msra.mxu0 0.0
    %705 = vmatprep.subr.mxu0 0.0
    %706 = vmatpush1.msra.mxu0 0.0
    %707 = vmatprep.subr.mxu0 0.0
    %708 = vmatpush1.msra.mxu0 0.0
    %709 = vmatprep.subr.mxu0 0.0
    %710 = vmatpush1.msra.mxu0 0.0
    %711 = vmatprep.subr.mxu0 0.0
    %712 = vmatpush1.msra.mxu0 0.0
    %713 = vmatprep.subr.mxu0 0.0
    %714 = vmatpush1.msra.mxu0 0.0
    %715 = vmatprep.subr.mxu0 0.0
    %716 = vmatpush1.msra.mxu0 0.0
    %717 = vmatprep.subr.mxu0 0.0
    %718 = vmatpush1.msra.mxu0 0.0
    %719 = vmatprep.subr.mxu0 0.0
    %720 = vmatpush1.msra.mxu0 0.0
    %721 = vmatprep.subr.mxu0 0.0
    %722 = vmatpush1.msra.mxu0 0.0
    %723 = vmatprep.subr.mxu0 0.0
    %724 = vmatpush1.msra.mxu0 0.0
    %725 = vmatprep.subr.mxu0 0.0
    %726 = vmatpush1.msra.mxu0 0.0
    %727 = vmatprep.subr.mxu0 0.0
    %728 = vmatpush1.msra.mxu0 0.0
    %729 = vmatprep.mubr.f32.mxu0 0.0
    %730 = vmatmul.mubr.f32.gmra.mrb[0].mxu0 %v559
    %v731 = vpop.f32.mrb[0].mxu0
    %v732 = vadd.f32 0.0, %v731
    %v733 = vpop.f32.mrb[0].mxu0
    %734 = vmatprep.mubr.f32.mxu0 0.0
    %735 = vmatmul.mubr.f32.gmra.mrb[0].mxu0 %v561
    %v736 = vpop.f32.mrb[0].mxu0
    %v737 = vadd.f32 0.0, %v736
    %v738 = vpop.f32.mrb[0].mxu0
    %739 = vmatprep.mubr.f32.mxu0 0.0
    %740 = vmatmul.mubr.f32.gmra.mrb[0].mxu0 %v563
    %v741 = vpop.f32.mrb[0].mxu0
    %v742 = vadd.f32 0.0, %v741
    %v743 = vpop.f32.mrb[0].mxu0
    %744 = vmatprep.mubr.f32.mxu0 0.0
    %745 = vmatmul.mubr.f32.gmra.mrb[0].mxu0 %v565
    %v746 = vpop.f32.mrb[0].mxu0
    %v747 = vadd.f32 0.0, %v746
    %v748 = vpop.f32.mrb[0].mxu0
    %749 = vdwg.mxu0
    %v750 = vadd.f32 %v422, %v643
    %v751 = vadd.f32 %v424, %v645
    %v752 = vadd.f32 %v511, %v732
    %v753 = vadd.f32 %v428, %v649
    %v754 = vadd.f32 %v430, %v651
    %v755 = vadd.f32 %v516, %v737
    %v756 = vadd.f32 %v434, %v655
    %v757 = vadd.f32 %v436, %v657
    %v758 = vadd.f32 %v521, %v742
    %v759 = vadd.f32 %v440, %v661
    %v760 = vadd.f32 %v442, %v663
    %v761 = vadd.f32 %v526, %v747
    %v762 = vrot.slane %v85, 3
    %v763 = vrot.slane %v86, 3
    %v764 = vsel %vm154, %v762, %v763
    %v765 = vrot.slane %v87, 3
    %v766 = vsel %vm154, %v763, %v765
    %v767 = vrot.slane %v88, 3
    %v768 = vrot.slane %v89, 3
    %v769 = vsel %vm154, %v767, %v768
    %v770 = vrot.slane %v90, 3
    %v771 = vsel %vm154, %v768, %v770
    %s772 = scalar_lea.vmem [#allocation5], 432
    %v773 = vld [vmem:[%s772] sm:$0xff]
    %v774 = vld [vmem:[%s772 + $0x8] sm:$0xff]
    %v775 = vld [vmem:[%s772 + $0x10] sm:$0xff]
    %v776 = vld [vmem:[%s772 + $0x18] sm:$0xff]
    %v777 = vld [vmem:[%s772 + $0x20] sm:$0xff]
    %v778 = vld [vmem:[%s772 + $0x28] sm:$0xff]
    %v779 = vld [vmem:[%s772 + $0x30] sm:$0xff]
    %v780 = vld [vmem:[%s772 + $0x38] sm:$0xff]
    %v781 = vld [vmem:[%s772 + $0x40] sm:$0xff]
    %v782 = vld [vmem:[%s772 + $0x48] sm:$0xff]
    %v783 = vld [vmem:[%s772 + $0x50] sm:$0xff]
    %v784 = vld [vmem:[%s772 + $0x58] sm:$0xff]
    %v785 = vld [vmem:[%s772 + $0x60] sm:$0xff]
    %v786 = vld [vmem:[%s772 + $0x68] sm:$0xff]
    %v787 = vld [vmem:[%s772 + $0x70] sm:$0xff]
    %v788 = vld [vmem:[%s772 + $0x78] sm:$0x1f]
    %v789 = vld [vmem:[%s772 + $0x80] sm:$0x1f]
    %v790 = vld [vmem:[%s772 + $0x88] sm:$0x1f]
    %v791 = vsel %vm145, %v764, 0
    %v793 = vsel %vm145, %v766, 0
    %v795 = vsel %vm145, %v769, 0
    %v797 = vsel %vm145, %v771, 0
    %v800 = vsel %vm154, %v788, 0
    %v803 = vsel %vm154, %v789, 0
    %v806 = vsel %vm154, %v790, 0
    %808 = vmatprep.subr.mxu0 %v774
    %809 = vmatpush1.msra.mxu0 %v773
    %810 = vmatprep.subr.mxu0 %v777
    %811 = vmatpush1.msra.mxu0 %v776
    %812 = vmatprep.subr.mxu0 %v780
    %813 = vmatpush1.msra.mxu0 %v779
    %814 = vmatprep.subr.mxu0 %v783
    %815 = vmatpush1.msra.mxu0 %v782
    %816 = vmatprep.subr.mxu0 %v786
    %817 = vmatpush1.msra.mxu0 %v785
    %818 = vmatprep.subr.mxu0 %v803
    %819 = vmatpush1.msra.mxu0 %v800
    %820 = vmatprep.subr.mxu0 0.0
    %821 = vmatpush1.msra.mxu0 0.0
    %822 = vmatprep.subr.mxu0 0.0
    %823 = vmatpush1.msra.mxu0 0.0
    %824 = vmatprep.subr.mxu0 0.0
    %825 = vmatpush1.msra.mxu0 0.0
    %826 = vmatprep.subr.mxu0 0.0
    %827 = vmatpush1.msra.mxu0 0.0
    %828 = vmatprep.subr.mxu0 0.0
    %829 = vmatpush1.msra.mxu0 0.0
    %830 = vmatprep.subr.mxu0 0.0
    %831 = vmatpush1.msra.mxu0 0.0
    %832 = vmatprep.subr.mxu0 0.0
    %833 = vmatpush1.msra.mxu0 0.0
    %834 = vmatprep.subr.mxu0 0.0
    %835 = vmatpush1.msra.mxu0 0.0
    %836 = vmatprep.subr.mxu0 0.0
    %837 = vmatpush1.msra.mxu0 0.0
    %838 = vmatprep.subr.mxu0 0.0
    %839 = vmatpush1.msra.mxu0 0.0
    %840 = vmatprep.subr.mxu0 0.0
    %841 = vmatpush1.msra.mxu0 0.0
    %842 = vmatprep.subr.mxu0 0.0
    %843 = vmatpush1.msra.mxu0 0.0
    %844 = vmatprep.subr.mxu0 0.0
    %845 = vmatpush1.msra.mxu0 0.0
    %846 = vmatprep.subr.mxu0 0.0
    %847 = vmatpush1.msra.mxu0 0.0
    %848 = vmatprep.subr.mxu0 0.0
    %849 = vmatpush1.msra.mxu0 0.0
    %850 = vmatprep.subr.mxu0 0.0
    %851 = vmatpush1.msra.mxu0 0.0
    %852 = vmatprep.subr.mxu0 0.0
    %853 = vmatpush1.msra.mxu0 0.0
    %854 = vmatprep.subr.mxu0 0.0
    %855 = vmatpush1.msra.mxu0 0.0
    %856 = vmatprep.subr.mxu0 0.0
    %857 = vmatpush1.msra.mxu0 0.0
    %858 = vmatprep.subr.mxu0 0.0
    %859 = vmatpush1.msra.mxu0 0.0
    %860 = vmatprep.subr.mxu0 0.0
    %861 = vmatpush1.msra.mxu0 0.0
    %862 = vmatprep.subr.mxu0 0.0
    %863 = vmatpush1.msra.mxu0 0.0
    %864 = vmatprep.subr.mxu0 0.0
    %865 = vmatpush1.msra.mxu0 0.0
    %866 = vmatprep.subr.mxu0 0.0
    %867 = vmatpush1.msra.mxu0 0.0
    %868 = vmatprep.subr.mxu0 0.0
    %869 = vmatpush1.msra.mxu0 0.0
    %870 = vmatprep.subr.mxu0 0.0
    %871 = vmatpush1.msra.mxu0 0.0
    %872 = vmatprep.mubr.f32.mxu0 0.0
    %873 = vmatmul.mubr.f32.gmra.mrb[0].mxu0 %v791
    %v874 = vpop.f32.mrb[0].mxu0
    %v875 = vadd.f32 0.0, %v874
    %v876 = vpop.f32.mrb[0].mxu0
    %v877 = vadd.f32 0.0, %v876
    %878 = vmatprep.mubr.f32.mxu0 0.0
    %879 = vmatmul.mubr.f32.gmra.mrb[0].mxu0 %v793
    %v880 = vpop.f32.mrb[0].mxu0
    %v881 = vadd.f32 0.0, %v880
    %v882 = vpop.f32.mrb[0].mxu0
    %v883 = vadd.f32 0.0, %v882
    %884 = vmatprep.mubr.f32.mxu0 0.0
    %885 = vmatmul.mubr.f32.gmra.mrb[0].mxu0 %v795
    %v886 = vpop.f32.mrb[0].mxu0
    %v887 = vadd.f32 0.0, %v886
    %v888 = vpop.f32.mrb[0].mxu0
    %v889 = vadd.f32 0.0, %v888
    %890 = vmatprep.mubr.f32.mxu0 0.0
    %891 = vmatmul.mubr.f32.gmra.mrb[0].mxu0 %v797
    %v892 = vpop.f32.mrb[0].mxu0
    %v893 = vadd.f32 0.0, %v892
    %v894 = vpop.f32.mrb[0].mxu0
    %v895 = vadd.f32 0.0, %v894
    %896 = vdwg.mxu0
    %897 = vmatprep.subr.mxu0 0.0
    %898 = vmatpush1.msra.mxu0 %v775
    %899 = vmatprep.subr.mxu0 0.0
    %900 = vmatpush1.msra.mxu0 %v778
    %901 = vmatprep.subr.mxu0 0.0
    %902 = vmatpush1.msra.mxu0 %v781
    %903 = vmatprep.subr.mxu0 0.0
    %904 = vmatpush1.msra.mxu0 %v784
    %905 = vmatprep.subr.mxu0 0.0
    %906 = vmatpush1.msra.mxu0 %v787
    %907 = vmatprep.subr.mxu0 0.0
    %908 = vmatpush1.msra.mxu0 %v806
    %909 = vmatprep.subr.mxu0 0.0
    %910 = vmatpush1.msra.mxu0 0.0
    %911 = vmatprep.subr.mxu0 0.0
    %912 = vmatpush1.msra.mxu0 0.0
    %913 = vmatprep.subr.mxu0 0.0
    %914 = vmatpush1.msra.mxu0 0.0
    %915 = vmatprep.subr.mxu0 0.0
    %916 = vmatpush1.msra.mxu0 0.0
    %917 = vmatprep.subr.mxu0 0.0
    %918 = vmatpush1.msra.mxu0 0.0
    %919 = vmatprep.subr.mxu0 0.0
    %920 = vmatpush1.msra.mxu0 0.0
    %921 = vmatprep.subr.mxu0 0.0
    %922 = vmatpush1.msra.mxu0 0.0
    %923 = vmatprep.subr.mxu0 0.0
    %924 = vmatpush1.msra.mxu0 0.0
    %925 = vmatprep.subr.mxu0 0.0
    %926 = vmatpush1.msra.mxu0 0.0
    %927 = vmatprep.subr.mxu0 0.0
    %928 = vmatpush1.msra.mxu0 0.0
    %929 = vmatprep.subr.mxu0 0.0
    %930 = vmatpush1.msra.mxu0 0.0
    %931 = vmatprep.subr.mxu0 0.0
    %932 = vmatpush1.msra.mxu0 0.0
    %933 = vmatprep.subr.mxu0 0.0
    %934 = vmatpush1.msra.mxu0 0.0
    %935 = vmatprep.subr.mxu0 0.0
    %936 = vmatpush1.msra.mxu0 0.0
    %937 = vmatprep.subr.mxu0 0.0
    %938 = vmatpush1.msra.mxu0 0.0
    %939 = vmatprep.subr.mxu0 0.0
    %940 = vmatpush1.msra.mxu0 0.0
    %941 = vmatprep.subr.mxu0 0.0
    %942 = vmatpush1.msra.mxu0 0.0
    %943 = vmatprep.subr.mxu0 0.0
    %944 = vmatpush1.msra.mxu0 0.0
    %945 = vmatprep.subr.mxu0 0.0
    %946 = vmatpush1.msra.mxu0 0.0
    %947 = vmatprep.subr.mxu0 0.0
    %948 = vmatpush1.msra.mxu0 0.0
    %949 = vmatprep.subr.mxu0 0.0
    %950 = vmatpush1.msra.mxu0 0.0
    %951 = vmatprep.subr.mxu0 0.0
    %952 = vmatpush1.msra.mxu0 0.0
    %953 = vmatprep.subr.mxu0 0.0
    %954 = vmatpush1.msra.mxu0 0.0
    %955 = vmatprep.subr.mxu0 0.0
    %956 = vmatpush1.msra.mxu0 0.0
    %957 = vmatprep.subr.mxu0 0.0
    %958 = vmatpush1.msra.mxu0 0.0
    %959 = vmatprep.subr.mxu0 0.0
    %960 = vmatpush1.msra.mxu0 0.0
    %961 = vmatprep.mubr.f32.mxu0 0.0
    %962 = vmatmul.mubr.f32.gmra.mrb[0].mxu0 %v791
    %v963 = vpop.f32.mrb[0].mxu0
    %v964 = vadd.f32 0.0, %v963
    %v965 = vpop.f32.mrb[0].mxu0
    %966 = vmatprep.mubr.f32.mxu0 0.0
    %967 = vmatmul.mubr.f32.gmra.mrb[0].mxu0 %v793
    %v968 = vpop.f32.mrb[0].mxu0
    %v969 = vadd.f32 0.0, %v968
    %v970 = vpop.f32.mrb[0].mxu0
    %971 = vmatprep.mubr.f32.mxu0 0.0
    %972 = vmatmul.mubr.f32.gmra.mrb[0].mxu0 %v795
    %v973 = vpop.f32.mrb[0].mxu0
    %v974 = vadd.f32 0.0, %v973
    %v975 = vpop.f32.mrb[0].mxu0
    %976 = vmatprep.mubr.f32.mxu0 0.0
    %977 = vmatmul.mubr.f32.gmra.mrb[0].mxu0 %v797
    %v978 = vpop.f32.mrb[0].mxu0
    %v979 = vadd.f32 0.0, %v978
    %v980 = vpop.f32.mrb[0].mxu0
    %981 = vdwg.mxu0
    %v982 = vadd.f32 %v750, %v875
    %v983 = vadd.f32 %v751, %v877
    %v984 = vadd.f32 %v752, %v964
    %v985 = vadd.f32 %v753, %v881
    %v986 = vadd.f32 %v754, %v883
    %v987 = vadd.f32 %v755, %v969
    %v988 = vadd.f32 %v756, %v887
    %v989 = vadd.f32 %v757, %v889
    %v990 = vadd.f32 %v758, %v974
    %v991 = vadd.f32 %v759, %v893
    %v992 = vadd.f32 %v760, %v895
    %v993 = vadd.f32 %v761, %v979
    %vm994 = vcmask 1043456
    %v995 = vrot.slane %v85, 4
    %v996 = vrot.slane %v86, 4
    %v997 = vsel %vm994, %v995, %v996
    %v998 = vrot.slane %v87, 4
    %v999 = vsel %vm994, %v996, %v998
    %v1000 = vrot.slane %v88, 4
    %v1001 = vrot.slane %v89, 4
    %v1002 = vsel %vm994, %v1000, %v1001
    %v1003 = vrot.slane %v90, 4
    %v1004 = vsel %vm994, %v1001, %v1003
    %s1005 = scalar_lea.vmem [#allocation5], 576
    %v1006 = vld [vmem:[%s1005] sm:$0xff]
    %v1007 = vld [vmem:[%s1005 + $0x8] sm:$0xff]
    %v1008 = vld [vmem:[%s1005 + $0x10] sm:$0xff]
    %v1009 = vld [vmem:[%s1005 + $0x18] sm:$0xff]
    %v1010 = vld [vmem:[%s1005 + $0x20] sm:$0xff]
    %v1011 = vld [vmem:[%s1005 + $0x28] sm:$0xff]
    %v1012 = vld [vmem:[%s1005 + $0x30] sm:$0xff]
    %v1013 = vld [vmem:[%s1005 + $0x38] sm:$0xff]
    %v1014 = vld [vmem:[%s1005 + $0x40] sm:$0xff]
    %v1015 = vld [vmem:[%s1005 + $0x48] sm:$0xff]
    %v1016 = vld [vmem:[%s1005 + $0x50] sm:$0xff]
    %v1017 = vld [vmem:[%s1005 + $0x58] sm:$0xff]
    %v1018 = vld [vmem:[%s1005 + $0x60] sm:$0xff]
    %v1019 = vld [vmem:[%s1005 + $0x68] sm:$0xff]
    %v1020 = vld [vmem:[%s1005 + $0x70] sm:$0xff]
    %v1021 = vld [vmem:[%s1005 + $0x78] sm:$0x1f]
    %v1022 = vld [vmem:[%s1005 + $0x80] sm:$0x1f]
    %v1023 = vld [vmem:[%s1005 + $0x88] sm:$0x1f]
    %v1024 = vsel %vm145, %v997, 0
    %v1026 = vsel %vm145, %v999, 0
    %v1028 = vsel %vm145, %v1002, 0
    %v1030 = vsel %vm145, %v1004, 0
    %v1033 = vsel %vm154, %v1021, 0
    %v1036 = vsel %vm154, %v1022, 0
    %v1039 = vsel %vm154, %v1023, 0
    %1041 = vmatprep.subr.mxu0 %v1007
    %1042 = vmatpush1.msra.mxu0 %v1006
    %1043 = vmatprep.subr.mxu0 %v1010
    %1044 = vmatpush1.msra.mxu0 %v1009
    %1045 = vmatprep.subr.mxu0 %v1013
    %1046 = vmatpush1.msra.mxu0 %v1012
    %1047 = vmatprep.subr.mxu0 %v1016
    %1048 = vmatpush1.msra.mxu0 %v1015
    %1049 = vmatprep.subr.mxu0 %v1019
    %1050 = vmatpush1.msra.mxu0 %v1018
    %1051 = vmatprep.subr.mxu0 %v1036
    %1052 = vmatpush1.msra.mxu0 %v1033
    %1053 = vmatprep.subr.mxu0 0.0
    %1054 = vmatpush1.msra.mxu0 0.0
    %1055 = vmatprep.subr.mxu0 0.0
    %1056 = vmatpush1.msra.mxu0 0.0
    %1057 = vmatprep.subr.mxu0 0.0
    %1058 = vmatpush1.msra.mxu0 0.0
    %1059 = vmatprep.subr.mxu0 0.0
    %1060 = vmatpush1.msra.mxu0 0.0
    %1061 = vmatprep.subr.mxu0 0.0
    %1062 = vmatpush1.msra.mxu0 0.0
    %1063 = vmatprep.subr.mxu0 0.0
    %1064 = vmatpush1.msra.mxu0 0.0
    %1065 = vmatprep.subr.mxu0 0.0
    %1066 = vmatpush1.msra.mxu0 0.0
    %1067 = vmatprep.subr.mxu0 0.0
    %1068 = vmatpush1.msra.mxu0 0.0
    %1069 = vmatprep.subr.mxu0 0.0
    %1070 = vmatpush1.msra.mxu0 0.0
    %1071 = vmatprep.subr.mxu0 0.0
    %1072 = vmatpush1.msra.mxu0 0.0
    %1073 = vmatprep.subr.mxu0 0.0
    %1074 = vmatpush1.msra.mxu0 0.0
    %1075 = vmatprep.subr.mxu0 0.0
    %1076 = vmatpush1.msra.mxu0 0.0
    %1077 = vmatprep.subr.mxu0 0.0
    %1078 = vmatpush1.msra.mxu0 0.0
    %1079 = vmatprep.subr.mxu0 0.0
    %1080 = vmatpush1.msra.mxu0 0.0
    %1081 = vmatprep.subr.mxu0 0.0
    %1082 = vmatpush1.msra.mxu0 0.0
    %1083 = vmatprep.subr.mxu0 0.0
    %1084 = vmatpush1.msra.mxu0 0.0
    %1085 = vmatprep.subr.mxu0 0.0
    %1086 = vmatpush1.msra.mxu0 0.0
    %1087 = vmatprep.subr.mxu0 0.0
    %1088 = vmatpush1.msra.mxu0 0.0
    %1089 = vmatprep.subr.mxu0 0.0
    %1090 = vmatpush1.msra.mxu0 0.0
    %1091 = vmatprep.subr.mxu0 0.0
    %1092 = vmatpush1.msra.mxu0 0.0
    %1093 = vmatprep.subr.mxu0 0.0
    %1094 = vmatpush1.msra.mxu0 0.0
    %1095 = vmatprep.subr.mxu0 0.0
    %1096 = vmatpush1.msra.mxu0 0.0
    %1097 = vmatprep.subr.mxu0 0.0
    %1098 = vmatpush1.msra.mxu0 0.0
    %1099 = vmatprep.subr.mxu0 0.0
    %1100 = vmatpush1.msra.mxu0 0.0
    %1101 = vmatprep.subr.mxu0 0.0
    %1102 = vmatpush1.msra.mxu0 0.0
    %1103 = vmatprep.subr.mxu0 0.0
    %1104 = vmatpush1.msra.mxu0 0.0
    %1105 = vmatprep.mubr.f32.mxu0 0.0
    %1106 = vmatmul.mubr.f32.gmra.mrb[0].mxu0 %v1024
    %v1107 = vpop.f32.mrb[0].mxu0
    %v1108 = vadd.f32 0.0, %v1107
    %v1109 = vpop.f32.mrb[0].mxu0
    %v1110 = vadd.f32 0.0, %v1109
    %1111 = vmatprep.mubr.f32.mxu0 0.0
    %1112 = vmatmul.mubr.f32.gmra.mrb[0].mxu0 %v1026
    %v1113 = vpop.f32.mrb[0].mxu0
    %v1114 = vadd.f32 0.0, %v1113
    %v1115 = vpop.f32.mrb[0].mxu0
    %v1116 = vadd.f32 0.0, %v1115
    %1117 = vmatprep.mubr.f32.mxu0 0.0
    %1118 = vmatmul.mubr.f32.gmra.mrb[0].mxu0 %v1028
    %v1119 = vpop.f32.mrb[0].mxu0
    %v1120 = vadd.f32 0.0, %v1119
    %v1121 = vpop.f32.mrb[0].mxu0
    %v1122 = vadd.f32 0.0, %v1121
    %1123 = vmatprep.mubr.f32.mxu0 0.0
    %1124 = vmatmul.mubr.f32.gmra.mrb[0].mxu0 %v1030
    %v1125 = vpop.f32.mrb[0].mxu0
    %v1126 = vadd.f32 0.0, %v1125
    %v1127 = vpop.f32.mrb[0].mxu0
    %v1128 = vadd.f32 0.0, %v1127
    %1129 = vdwg.mxu0
    %1130 = vmatprep.subr.mxu0 0.0
    %1131 = vmatpush1.msra.mxu0 %v1008
    %1132 = vmatprep.subr.mxu0 0.0
    %1133 = vmatpush1.msra.mxu0 %v1011
    %1134 = vmatprep.subr.mxu0 0.0
    %1135 = vmatpush1.msra.mxu0 %v1014
    %1136 = vmatprep.subr.mxu0 0.0
    %1137 = vmatpush1.msra.mxu0 %v1017
    %1138 = vmatprep.subr.mxu0 0.0
    %1139 = vmatpush1.msra.mxu0 %v1020
    %1140 = vmatprep.subr.mxu0 0.0
    %1141 = vmatpush1.msra.mxu0 %v1039
    %1142 = vmatprep.subr.mxu0 0.0
    %1143 = vmatpush1.msra.mxu0 0.0
    %1144 = vmatprep.subr.mxu0 0.0
    %1145 = vmatpush1.msra.mxu0 0.0
    %1146 = vmatprep.subr.mxu0 0.0
    %1147 = vmatpush1.msra.mxu0 0.0
    %1148 = vmatprep.subr.mxu0 0.0
    %1149 = vmatpush1.msra.mxu0 0.0
    %1150 = vmatprep.subr.mxu0 0.0
    %1151 = vmatpush1.msra.mxu0 0.0
    %1152 = vmatprep.subr.mxu0 0.0
    %1153 = vmatpush1.msra.mxu0 0.0
    %1154 = vmatprep.subr.mxu0 0.0
    %1155 = vmatpush1.msra.mxu0 0.0
    %1156 = vmatprep.subr.mxu0 0.0
    %1157 = vmatpush1.msra.mxu0 0.0
    %1158 = vmatprep.subr.mxu0 0.0
    %1159 = vmatpush1.msra.mxu0 0.0
    %1160 = vmatprep.subr.mxu0 0.0
    %1161 = vmatpush1.msra.mxu0 0.0
    %1162 = vmatprep.subr.mxu0 0.0
    %1163 = vmatpush1.msra.mxu0 0.0
    %1164 = vmatprep.subr.mxu0 0.0
    %1165 = vmatpush1.msra.mxu0 0.0
    %1166 = vmatprep.subr.mxu0 0.0
    %1167 = vmatpush1.msra.mxu0 0.0
    %1168 = vmatprep.subr.mxu0 0.0
    %1169 = vmatpush1.msra.mxu0 0.0
    %1170 = vmatprep.subr.mxu0 0.0
    %1171 = vmatpush1.msra.mxu0 0.0
    %1172 = vmatprep.subr.mxu0 0.0
    %1173 = vmatpush1.msra.mxu0 0.0
    %1174 = vmatprep.subr.mxu0 0.0
    %1175 = vmatpush1.msra.mxu0 0.0
    %1176 = vmatprep.subr.mxu0 0.0
    %1177 = vmatpush1.msra.mxu0 0.0
    %1178 = vmatprep.subr.mxu0 0.0
    %1179 = vmatpush1.msra.mxu0 0.0
    %1180 = vmatprep.subr.mxu0 0.0
    %1181 = vmatpush1.msra.mxu0 0.0
    %1182 = vmatprep.subr.mxu0 0.0
    %1183 = vmatpush1.msra.mxu0 0.0
    %1184 = vmatprep.subr.mxu0 0.0
    %1185 = vmatpush1.msra.mxu0 0.0
    %1186 = vmatprep.subr.mxu0 0.0
    %1187 = vmatpush1.msra.mxu0 0.0
    %1188 = vmatprep.subr.mxu0 0.0
    %1189 = vmatpush1.msra.mxu0 0.0
    %1190 = vmatprep.subr.mxu0 0.0
    %1191 = vmatpush1.msra.mxu0 0.0
    %1192 = vmatprep.subr.mxu0 0.0
    %1193 = vmatpush1.msra.mxu0 0.0
    %1194 = vmatprep.mubr.f32.mxu0 0.0
    %1195 = vmatmul.mubr.f32.gmra.mrb[0].mxu0 %v1024
    %v1196 = vpop.f32.mrb[0].mxu0
    %v1197 = vadd.f32 0.0, %v1196
    %v1198 = vpop.f32.mrb[0].mxu0
    %1199 = vmatprep.mubr.f32.mxu0 0.0
    %1200 = vmatmul.mubr.f32.gmra.mrb[0].mxu0 %v1026
    %v1201 = vpop.f32.mrb[0].mxu0
    %v1202 = vadd.f32 0.0, %v1201
    %v1203 = vpop.f32.mrb[0].mxu0
    %1204 = vmatprep.mubr.f32.mxu0 0.0
    %1205 = vmatmul.mubr.f32.gmra.mrb[0].mxu0 %v1028
    %v1206 = vpop.f32.mrb[0].mxu0
    %v1207 = vadd.f32 0.0, %v1206
    %v1208 = vpop.f32.mrb[0].mxu0
    %1209 = vmatprep.mubr.f32.mxu0 0.0
    %1210 = vmatmul.mubr.f32.gmra.mrb[0].mxu0 %v1030
    %v1211 = vpop.f32.mrb[0].mxu0
    %v1212 = vadd.f32 0.0, %v1211
    %v1213 = vpop.f32.mrb[0].mxu0
    %1214 = vdwg.mxu0
    %v1215 = vadd.f32 %v982, %v1108
    %v1216 = vadd.f32 %v983, %v1110
    %v1217 = vadd.f32 %v984, %v1197
    %v1218 = vadd.f32 %v985, %v1114
    %v1219 = vadd.f32 %v986, %v1116
    %v1220 = vadd.f32 %v987, %v1202
    %v1221 = vadd.f32 %v988, %v1120
    %v1222 = vadd.f32 %v989, %v1122
    %v1223 = vadd.f32 %v990, %v1207
    %v1224 = vadd.f32 %v991, %v1126
    %v1225 = vadd.f32 %v992, %v1128
    %v1226 = vadd.f32 %v993, %v1212
    %vm1227 = vcmask 1042432
    %v1228 = vrot.slane %v85, 5
    %v1229 = vrot.slane %v86, 5
    %v1230 = vsel %vm1227, %v1228, %v1229
    %v1231 = vrot.slane %v87, 5
    %v1232 = vsel %vm1227, %v1229, %v1231
    %v1233 = vrot.slane %v88, 5
    %v1234 = vrot.slane %v89, 5
    %v1235 = vsel %vm1227, %v1233, %v1234
    %v1236 = vrot.slane %v90, 5
    %v1237 = vsel %vm1227, %v1234, %v1236
    %s1238 = scalar_lea.vmem [#allocation5], 720
    %v1239 = vld [vmem:[%s1238] sm:$0xff]
    %v1240 = vld [vmem:[%s1238 + $0x8] sm:$0xff]
    %v1241 = vld [vmem:[%s1238 + $0x10] sm:$0xff]
    %v1242 = vld [vmem:[%s1238 + $0x18] sm:$0xff]
    %v1243 = vld [vmem:[%s1238 + $0x20] sm:$0xff]
    %v1244 = vld [vmem:[%s1238 + $0x28] sm:$0xff]
    %v1245 = vld [vmem:[%s1238 + $0x30] sm:$0xff]
    %v1246 = vld [vmem:[%s1238 + $0x38] sm:$0xff]
    %v1247 = vld [vmem:[%s1238 + $0x40] sm:$0xff]
    %v1248 = vld [vmem:[%s1238 + $0x48] sm:$0xff]
    %v1249 = vld [vmem:[%s1238 + $0x50] sm:$0xff]
    %v1250 = vld [vmem:[%s1238 + $0x58] sm:$0xff]
    %v1251 = vld [vmem:[%s1238 + $0x60] sm:$0xff]
    %v1252 = vld [vmem:[%s1238 + $0x68] sm:$0xff]
    %v1253 = vld [vmem:[%s1238 + $0x70] sm:$0xff]
    %v1254 = vld [vmem:[%s1238 + $0x78] sm:$0x1f]
    %v1255 = vld [vmem:[%s1238 + $0x80] sm:$0x1f]
    %v1256 = vld [vmem:[%s1238 + $0x88] sm:$0x1f]
    %v1257 = vsel %vm145, %v1230, 0
    %v1259 = vsel %vm145, %v1232, 0
    %v1261 = vsel %vm145, %v1235, 0
    %v1263 = vsel %vm145, %v1237, 0
    %v1266 = vsel %vm154, %v1254, 0
    %v1269 = vsel %vm154, %v1255, 0
    %v1272 = vsel %vm154, %v1256, 0
    %1274 = vmatprep.subr.mxu0 %v1240
    %1275 = vmatpush1.msra.mxu0 %v1239
    %1276 = vmatprep.subr.mxu0 %v1243
    %1277 = vmatpush1.msra.mxu0 %v1242
    %1278 = vmatprep.subr.mxu0 %v1246
    %1279 = vmatpush1.msra.mxu0 %v1245
    %1280 = vmatprep.subr.mxu0 %v1249
    %1281 = vmatpush1.msra.mxu0 %v1248
    %1282 = vmatprep.subr.mxu0 %v1252
    %1283 = vmatpush1.msra.mxu0 %v1251
    %1284 = vmatprep.subr.mxu0 %v1269
    %1285 = vmatpush1.msra.mxu0 %v1266
    %1286 = vmatprep.subr.mxu0 0.0
    %1287 = vmatpush1.msra.mxu0 0.0
    %1288 = vmatprep.subr.mxu0 0.0
    %1289 = vmatpush1.msra.mxu0 0.0
    %1290 = vmatprep.subr.mxu0 0.0
    %1291 = vmatpush1.msra.mxu0 0.0
    %1292 = vmatprep.subr.mxu0 0.0
    %1293 = vmatpush1.msra.mxu0 0.0
    %1294 = vmatprep.subr.mxu0 0.0
    %1295 = vmatpush1.msra.mxu0 0.0
    %1296 = vmatprep.subr.mxu0 0.0
    %1297 = vmatpush1.msra.mxu0 0.0
    %1298 = vmatprep.subr.mxu0 0.0
    %1299 = vmatpush1.msra.mxu0 0.0
    %1300 = vmatprep.subr.mxu0 0.0
    %1301 = vmatpush1.msra.mxu0 0.0
    %1302 = vmatprep.subr.mxu0 0.0
    %1303 = vmatpush1.msra.mxu0 0.0
    %1304 = vmatprep.subr.mxu0 0.0
    %1305 = vmatpush1.msra.mxu0 0.0
    %1306 = vmatprep.subr.mxu0 0.0
    %1307 = vmatpush1.msra.mxu0 0.0
    %1308 = vmatprep.subr.mxu0 0.0
    %1309 = vmatpush1.msra.mxu0 0.0
    %1310 = vmatprep.subr.mxu0 0.0
    %1311 = vmatpush1.msra.mxu0 0.0
    %1312 = vmatprep.subr.mxu0 0.0
    %1313 = vmatpush1.msra.mxu0 0.0
    %1314 = vmatprep.subr.mxu0 0.0
    %1315 = vmatpush1.msra.mxu0 0.0
    %1316 = vmatprep.subr.mxu0 0.0
    %1317 = vmatpush1.msra.mxu0 0.0
    %1318 = vmatprep.subr.mxu0 0.0
    %1319 = vmatpush1.msra.mxu0 0.0
    %1320 = vmatprep.subr.mxu0 0.0
    %1321 = vmatpush1.msra.mxu0 0.0
    %1322 = vmatprep.subr.mxu0 0.0
    %1323 = vmatpush1.msra.mxu0 0.0
    %1324 = vmatprep.subr.mxu0 0.0
    %1325 = vmatpush1.msra.mxu0 0.0
    %1326 = vmatprep.subr.mxu0 0.0
    %1327 = vmatpush1.msra.mxu0 0.0
    %1328 = vmatprep.subr.mxu0 0.0
    %1329 = vmatpush1.msra.mxu0 0.0
    %1330 = vmatprep.subr.mxu0 0.0
    %1331 = vmatpush1.msra.mxu0 0.0
    %1332 = vmatprep.subr.mxu0 0.0
    %1333 = vmatpush1.msra.mxu0 0.0
    %1334 = vmatprep.subr.mxu0 0.0
    %1335 = vmatpush1.msra.mxu0 0.0
    %1336 = vmatprep.subr.mxu0 0.0
    %1337 = vmatpush1.msra.mxu0 0.0
    %1338 = vmatprep.mubr.f32.mxu0 0.0
    %1339 = vmatmul.mubr.f32.gmra.mrb[0].mxu0 %v1257
    %v1340 = vpop.f32.mrb[0].mxu0
    %v1341 = vadd.f32 0.0, %v1340
    %v1342 = vpop.f32.mrb[0].mxu0
    %v1343 = vadd.f32 0.0, %v1342
    %1344 = vmatprep.mubr.f32.mxu0 0.0
    %1345 = vmatmul.mubr.f32.gmra.mrb[0].mxu0 %v1259
    %v1346 = vpop.f32.mrb[0].mxu0
    %v1347 = vadd.f32 0.0, %v1346
    %v1348 = vpop.f32.mrb[0].mxu0
    %v1349 = vadd.f32 0.0, %v1348
    %1350 = vmatprep.mubr.f32.mxu0 0.0
    %1351 = vmatmul.mubr.f32.gmra.mrb[0].mxu0 %v1261
    %v1352 = vpop.f32.mrb[0].mxu0
    %v1353 = vadd.f32 0.0, %v1352
    %v1354 = vpop.f32.mrb[0].mxu0
    %v1355 = vadd.f32 0.0, %v1354
    %1356 = vmatprep.mubr.f32.mxu0 0.0
    %1357 = vmatmul.mubr.f32.gmra.mrb[0].mxu0 %v1263
    %v1358 = vpop.f32.mrb[0].mxu0
    %v1359 = vadd.f32 0.0, %v1358
    %v1360 = vpop.f32.mrb[0].mxu0
    %v1361 = vadd.f32 0.0, %v1360
    %1362 = vdwg.mxu0
    %1363 = vmatprep.subr.mxu0 0.0
    %1364 = vmatpush1.msra.mxu0 %v1241
    %1365 = vmatprep.subr.mxu0 0.0
    %1366 = vmatpush1.msra.mxu0 %v1244
    %1367 = vmatprep.subr.mxu0 0.0
    %1368 = vmatpush1.msra.mxu0 %v1247
    %1369 = vmatprep.subr.mxu0 0.0
    %1370 = vmatpush1.msra.mxu0 %v1250
    %1371 = vmatprep.subr.mxu0 0.0
    %1372 = vmatpush1.msra.mxu0 %v1253
    %1373 = vmatprep.subr.mxu0 0.0
    %1374 = vmatpush1.msra.mxu0 %v1272
    %1375 = vmatprep.subr.mxu0 0.0
    %1376 = vmatpush1.msra.mxu0 0.0
    %1377 = vmatprep.subr.mxu0 0.0
    %1378 = vmatpush1.msra.mxu0 0.0
    %1379 = vmatprep.subr.mxu0 0.0
    %1380 = vmatpush1.msra.mxu0 0.0
    %1381 = vmatprep.subr.mxu0 0.0
    %1382 = vmatpush1.msra.mxu0 0.0
    %1383 = vmatprep.subr.mxu0 0.0
    %1384 = vmatpush1.msra.mxu0 0.0
    %1385 = vmatprep.subr.mxu0 0.0
    %1386 = vmatpush1.msra.mxu0 0.0
    %1387 = vmatprep.subr.mxu0 0.0
    %1388 = vmatpush1.msra.mxu0 0.0
    %1389 = vmatprep.subr.mxu0 0.0
    %1390 = vmatpush1.msra.mxu0 0.0
    %1391 = vmatprep.subr.mxu0 0.0
    %1392 = vmatpush1.msra.mxu0 0.0
    %1393 = vmatprep.subr.mxu0 0.0
    %1394 = vmatpush1.msra.mxu0 0.0
    %1395 = vmatprep.subr.mxu0 0.0
    %1396 = vmatpush1.msra.mxu0 0.0
    %1397 = vmatprep.subr.mxu0 0.0
    %1398 = vmatpush1.msra.mxu0 0.0
    %1399 = vmatprep.subr.mxu0 0.0
    %1400 = vmatpush1.msra.mxu0 0.0
    %1401 = vmatprep.subr.mxu0 0.0
    %1402 = vmatpush1.msra.mxu0 0.0
    %1403 = vmatprep.subr.mxu0 0.0
    %1404 = vmatpush1.msra.mxu0 0.0
    %1405 = vmatprep.subr.mxu0 0.0
    %1406 = vmatpush1.msra.mxu0 0.0
    %1407 = vmatprep.subr.mxu0 0.0
    %1408 = vmatpush1.msra.mxu0 0.0
    %1409 = vmatprep.subr.mxu0 0.0
    %1410 = vmatpush1.msra.mxu0 0.0
    %1411 = vmatprep.subr.mxu0 0.0
    %1412 = vmatpush1.msra.mxu0 0.0
    %1413 = vmatprep.subr.mxu0 0.0
    %1414 = vmatpush1.msra.mxu0 0.0
    %1415 = vmatprep.subr.mxu0 0.0
    %1416 = vmatpush1.msra.mxu0 0.0
    %1417 = vmatprep.subr.mxu0 0.0
    %1418 = vmatpush1.msra.mxu0 0.0
    %1419 = vmatprep.subr.mxu0 0.0
    %1420 = vmatpush1.msra.mxu0 0.0
    %1421 = vmatprep.subr.mxu0 0.0
    %1422 = vmatpush1.msra.mxu0 0.0
    %1423 = vmatprep.subr.mxu0 0.0
    %1424 = vmatpush1.msra.mxu0 0.0
    %1425 = vmatprep.subr.mxu0 0.0
    %1426 = vmatpush1.msra.mxu0 0.0
    %1427 = vmatprep.mubr.f32.mxu0 0.0
    %1428 = vmatmul.mubr.f32.gmra.mrb[0].mxu0 %v1257
    %v1429 = vpop.f32.mrb[0].mxu0
    %v1430 = vadd.f32 0.0, %v1429
    %v1431 = vpop.f32.mrb[0].mxu0
    %1432 = vmatprep.mubr.f32.mxu0 0.0
    %1433 = vmatmul.mubr.f32.gmra.mrb[0].mxu0 %v1259
    %v1434 = vpop.f32.mrb[0].mxu0
    %v1435 = vadd.f32 0.0, %v1434
    %v1436 = vpop.f32.mrb[0].mxu0
    %1437 = vmatprep.mubr.f32.mxu0 0.0
    %1438 = vmatmul.mubr.f32.gmra.mrb[0].mxu0 %v1261
    %v1439 = vpop.f32.mrb[0].mxu0
    %v1440 = vadd.f32 0.0, %v1439
    %v1441 = vpop.f32.mrb[0].mxu0
    %1442 = vmatprep.mubr.f32.mxu0 0.0
    %1443 = vmatmul.mubr.f32.gmra.mrb[0].mxu0 %v1263
    %v1444 = vpop.f32.mrb[0].mxu0
    %v1445 = vadd.f32 0.0, %v1444
    %v1446 = vpop.f32.mrb[0].mxu0
    %1447 = vdwg.mxu0
    %v1448 = vadd.f32 %v1215, %v1341
    %v1449 = vadd.f32 %v1216, %v1343
    %v1450 = vadd.f32 %v1217, %v1430
    %v1451 = vadd.f32 %v1218, %v1347
    %v1452 = vadd.f32 %v1219, %v1349
    %v1453 = vadd.f32 %v1220, %v1435
    %v1454 = vadd.f32 %v1221, %v1353
    %v1455 = vadd.f32 %v1222, %v1355
    %v1456 = vadd.f32 %v1223, %v1440
    %v1457 = vadd.f32 %v1224, %v1359
    %v1458 = vadd.f32 %v1225, %v1361
    %v1459 = vadd.f32 %v1226, %v1445
    %vm1460 = vcmask 1041408
    %v1461 = vrot.slane %v85, 6
    %v1462 = vrot.slane %v86, 6
    %v1463 = vsel %vm1460, %v1461, %v1462
    %v1464 = vrot.slane %v87, 6
    %v1465 = vsel %vm1460, %v1462, %v1464
    %v1466 = vrot.slane %v88, 6
    %v1467 = vrot.slane %v89, 6
    %v1468 = vsel %vm1460, %v1466, %v1467
    %v1469 = vrot.slane %v90, 6
    %v1470 = vsel %vm1460, %v1467, %v1469
    %s1471 = scalar_lea.vmem [#allocation5], 864
    %v1472 = vld [vmem:[%s1471] sm:$0xff]
    %v1473 = vld [vmem:[%s1471 + $0x8] sm:$0xff]
    %v1474 = vld [vmem:[%s1471 + $0x10] sm:$0xff]
    %v1475 = vld [vmem:[%s1471 + $0x18] sm:$0xff]
    %v1476 = vld [vmem:[%s1471 + $0x20] sm:$0xff]
    %v1477 = vld [vmem:[%s1471 + $0x28] sm:$0xff]
    %v1478 = vld [vmem:[%s1471 + $0x30] sm:$0xff]
    %v1479 = vld [vmem:[%s1471 + $0x38] sm:$0xff]
    %v1480 = vld [vmem:[%s1471 + $0x40] sm:$0xff]
    %v1481 = vld [vmem:[%s1471 + $0x48] sm:$0xff]
    %v1482 = vld [vmem:[%s1471 + $0x50] sm:$0xff]
    %v1483 = vld [vmem:[%s1471 + $0x58] sm:$0xff]
    %v1484 = vld [vmem:[%s1471 + $0x60] sm:$0xff]
    %v1485 = vld [vmem:[%s1471 + $0x68] sm:$0xff]
    %v1486 = vld [vmem:[%s1471 + $0x70] sm:$0xff]
    %v1487 = vld [vmem:[%s1471 + $0x78] sm:$0x1f]
    %v1488 = vld [vmem:[%s1471 + $0x80] sm:$0x1f]
    %v1489 = vld [vmem:[%s1471 + $0x88] sm:$0x1f]
    %v1490 = vsel %vm145, %v1463, 0
    %v1492 = vsel %vm145, %v1465, 0
    %v1494 = vsel %vm145, %v1468, 0
    %v1496 = vsel %vm145, %v1470, 0
    %v1499 = vsel %vm154, %v1487, 0
    %v1502 = vsel %vm154, %v1488, 0
    %v1505 = vsel %vm154, %v1489, 0
    %1507 = vmatprep.subr.mxu0 %v1473
    %1508 = vmatpush1.msra.mxu0 %v1472
    %1509 = vmatprep.subr.mxu0 %v1476
    %1510 = vmatpush1.msra.mxu0 %v1475
    %1511 = vmatprep.subr.mxu0 %v1479
    %1512 = vmatpush1.msra.mxu0 %v1478
    %1513 = vmatprep.subr.mxu0 %v1482
    %1514 = vmatpush1.msra.mxu0 %v1481
    %1515 = vmatprep.subr.mxu0 %v1485
    %1516 = vmatpush1.msra.mxu0 %v1484
    %1517 = vmatprep.subr.mxu0 %v1502
    %1518 = vmatpush1.msra.mxu0 %v1499
    %1519 = vmatprep.subr.mxu0 0.0
    %1520 = vmatpush1.msra.mxu0 0.0
    %1521 = vmatprep.subr.mxu0 0.0
    %1522 = vmatpush1.msra.mxu0 0.0
    %1523 = vmatprep.subr.mxu0 0.0
    %1524 = vmatpush1.msra.mxu0 0.0
    %1525 = vmatprep.subr.mxu0 0.0
    %1526 = vmatpush1.msra.mxu0 0.0
    %1527 = vmatprep.subr.mxu0 0.0
    %1528 = vmatpush1.msra.mxu0 0.0
    %1529 = vmatprep.subr.mxu0 0.0
    %1530 = vmatpush1.msra.mxu0 0.0
    %1531 = vmatprep.subr.mxu0 0.0
    %1532 = vmatpush1.msra.mxu0 0.0
    %1533 = vmatprep.subr.mxu0 0.0
    %1534 = vmatpush1.msra.mxu0 0.0
    %1535 = vmatprep.subr.mxu0 0.0
    %1536 = vmatpush1.msra.mxu0 0.0
    %1537 = vmatprep.subr.mxu0 0.0
    %1538 = vmatpush1.msra.mxu0 0.0
    %1539 = vmatprep.subr.mxu0 0.0
    %1540 = vmatpush1.msra.mxu0 0.0
    %1541 = vmatprep.subr.mxu0 0.0
    %1542 = vmatpush1.msra.mxu0 0.0
    %1543 = vmatprep.subr.mxu0 0.0
    %1544 = vmatpush1.msra.mxu0 0.0
    %1545 = vmatprep.subr.mxu0 0.0
    %1546 = vmatpush1.msra.mxu0 0.0
    %1547 = vmatprep.subr.mxu0 0.0
    %1548 = vmatpush1.msra.mxu0 0.0
    %1549 = vmatprep.subr.mxu0 0.0
    %1550 = vmatpush1.msra.mxu0 0.0
    %1551 = vmatprep.subr.mxu0 0.0
    %1552 = vmatpush1.msra.mxu0 0.0
    %1553 = vmatprep.subr.mxu0 0.0
    %1554 = vmatpush1.msra.mxu0 0.0
    %1555 = vmatprep.subr.mxu0 0.0
    %1556 = vmatpush1.msra.mxu0 0.0
    %1557 = vmatprep.subr.mxu0 0.0
    %1558 = vmatpush1.msra.mxu0 0.0
    %1559 = vmatprep.subr.mxu0 0.0
    %1560 = vmatpush1.msra.mxu0 0.0
    %1561 = vmatprep.subr.mxu0 0.0
    %1562 = vmatpush1.msra.mxu0 0.0
    %1563 = vmatprep.subr.mxu0 0.0
    %1564 = vmatpush1.msra.mxu0 0.0
    %1565 = vmatprep.subr.mxu0 0.0
    %1566 = vmatpush1.msra.mxu0 0.0
    %1567 = vmatprep.subr.mxu0 0.0
    %1568 = vmatpush1.msra.mxu0 0.0
    %1569 = vmatprep.subr.mxu0 0.0
    %1570 = vmatpush1.msra.mxu0 0.0
    %1571 = vmatprep.mubr.f32.mxu0 0.0
    %1572 = vmatmul.mubr.f32.gmra.mrb[0].mxu0 %v1490
    %v1573 = vpop.f32.mrb[0].mxu0
    %v1574 = vadd.f32 0.0, %v1573
    %v1575 = vpop.f32.mrb[0].mxu0
    %v1576 = vadd.f32 0.0, %v1575
    %1577 = vmatprep.mubr.f32.mxu0 0.0
    %1578 = vmatmul.mubr.f32.gmra.mrb[0].mxu0 %v1492
    %v1579 = vpop.f32.mrb[0].mxu0
    %v1580 = vadd.f32 0.0, %v1579
    %v1581 = vpop.f32.mrb[0].mxu0
    %v1582 = vadd.f32 0.0, %v1581
    %1583 = vmatprep.mubr.f32.mxu0 0.0
    %1584 = vmatmul.mubr.f32.gmra.mrb[0].mxu0 %v1494
    %v1585 = vpop.f32.mrb[0].mxu0
    %v1586 = vadd.f32 0.0, %v1585
    %v1587 = vpop.f32.mrb[0].mxu0
    %v1588 = vadd.f32 0.0, %v1587
    %1589 = vmatprep.mubr.f32.mxu0 0.0
    %1590 = vmatmul.mubr.f32.gmra.mrb[0].mxu0 %v1496
    %v1591 = vpop.f32.mrb[0].mxu0
    %v1592 = vadd.f32 0.0, %v1591
    %v1593 = vpop.f32.mrb[0].mxu0
    %v1594 = vadd.f32 0.0, %v1593
    %1595 = vdwg.mxu0
    %1596 = vmatprep.subr.mxu0 0.0
    %1597 = vmatpush1.msra.mxu0 %v1474
    %1598 = vmatprep.subr.mxu0 0.0
    %1599 = vmatpush1.msra.mxu0 %v1477
    %1600 = vmatprep.subr.mxu0 0.0
    %1601 = vmatpush1.msra.mxu0 %v1480
    %1602 = vmatprep.subr.mxu0 0.0
    %1603 = vmatpush1.msra.mxu0 %v1483
    %1604 = vmatprep.subr.mxu0 0.0
    %1605 = vmatpush1.msra.mxu0 %v1486
    %1606 = vmatprep.subr.mxu0 0.0
    %1607 = vmatpush1.msra.mxu0 %v1505
    %1608 = vmatprep.subr.mxu0 0.0
    %1609 = vmatpush1.msra.mxu0 0.0
    %1610 = vmatprep.subr.mxu0 0.0
    %1611 = vmatpush1.msra.mxu0 0.0
    %1612 = vmatprep.subr.mxu0 0.0
    %1613 = vmatpush1.msra.mxu0 0.0
    %1614 = vmatprep.subr.mxu0 0.0
    %1615 = vmatpush1.msra.mxu0 0.0
    %1616 = vmatprep.subr.mxu0 0.0
    %1617 = vmatpush1.msra.mxu0 0.0
    %1618 = vmatprep.subr.mxu0 0.0
    %1619 = vmatpush1.msra.mxu0 0.0
    %1620 = vmatprep.subr.mxu0 0.0
    %1621 = vmatpush1.msra.mxu0 0.0
    %1622 = vmatprep.subr.mxu0 0.0
    %1623 = vmatpush1.msra.mxu0 0.0
    %1624 = vmatprep.subr.mxu0 0.0
    %1625 = vmatpush1.msra.mxu0 0.0
    %1626 = vmatprep.subr.mxu0 0.0
    %1627 = vmatpush1.msra.mxu0 0.0
    %1628 = vmatprep.subr.mxu0 0.0
    %1629 = vmatpush1.msra.mxu0 0.0
    %1630 = vmatprep.subr.mxu0 0.0
    %1631 = vmatpush1.msra.mxu0 0.0
    %1632 = vmatprep.subr.mxu0 0.0
    %1633 = vmatpush1.msra.mxu0 0.0
    %1634 = vmatprep.subr.mxu0 0.0
    %1635 = vmatpush1.msra.mxu0 0.0
    %1636 = vmatprep.subr.mxu0 0.0
    %1637 = vmatpush1.msra.mxu0 0.0
    %1638 = vmatprep.subr.mxu0 0.0
    %1639 = vmatpush1.msra.mxu0 0.0
    %1640 = vmatprep.subr.mxu0 0.0
    %1641 = vmatpush1.msra.mxu0 0.0
    %1642 = vmatprep.subr.mxu0 0.0
    %1643 = vmatpush1.msra.mxu0 0.0
    %1644 = vmatprep.subr.mxu0 0.0
    %1645 = vmatpush1.msra.mxu0 0.0
    %1646 = vmatprep.subr.mxu0 0.0
    %1647 = vmatpush1.msra.mxu0 0.0
    %1648 = vmatprep.subr.mxu0 0.0
    %1649 = vmatpush1.msra.mxu0 0.0
    %1650 = vmatprep.subr.mxu0 0.0
    %1651 = vmatpush1.msra.mxu0 0.0
    %1652 = vmatprep.subr.mxu0 0.0
    %1653 = vmatpush1.msra.mxu0 0.0
    %1654 = vmatprep.subr.mxu0 0.0
    %1655 = vmatpush1.msra.mxu0 0.0
    %1656 = vmatprep.subr.mxu0 0.0
    %1657 = vmatpush1.msra.mxu0 0.0
    %1658 = vmatprep.subr.mxu0 0.0
    %1659 = vmatpush1.msra.mxu0 0.0
    %1660 = vmatprep.mubr.f32.mxu0 0.0
    %1661 = vmatmul.mubr.f32.gmra.mrb[0].mxu0 %v1490
    %v1662 = vpop.f32.mrb[0].mxu0
    %v1663 = vadd.f32 0.0, %v1662
    %v1664 = vpop.f32.mrb[0].mxu0
    %1665 = vmatprep.mubr.f32.mxu0 0.0
    %1666 = vmatmul.mubr.f32.gmra.mrb[0].mxu0 %v1492
    %v1667 = vpop.f32.mrb[0].mxu0
    %v1668 = vadd.f32 0.0, %v1667
    %v1669 = vpop.f32.mrb[0].mxu0
    %1670 = vmatprep.mubr.f32.mxu0 0.0
    %1671 = vmatmul.mubr.f32.gmra.mrb[0].mxu0 %v1494
    %v1672 = vpop.f32.mrb[0].mxu0
    %v1673 = vadd.f32 0.0, %v1672
    %v1674 = vpop.f32.mrb[0].mxu0
    %1675 = vmatprep.mubr.f32.mxu0 0.0
    %1676 = vmatmul.mubr.f32.gmra.mrb[0].mxu0 %v1496
    %v1677 = vpop.f32.mrb[0].mxu0
    %v1678 = vadd.f32 0.0, %v1677
    %v1679 = vpop.f32.mrb[0].mxu0
    %1680 = vdwg.mxu0
    %v1681 = vadd.f32 %v1448, %v1574
    %v1682 = vadd.f32 %v1449, %v1576
    %v1683 = vadd.f32 %v1450, %v1663
    %v1684 = vadd.f32 %v1451, %v1580
    %v1685 = vadd.f32 %v1452, %v1582
    %v1686 = vadd.f32 %v1453, %v1668
    %v1687 = vadd.f32 %v1454, %v1586
    %v1688 = vadd.f32 %v1455, %v1588
    %v1689 = vadd.f32 %v1456, %v1673
    %v1690 = vadd.f32 %v1457, %v1592
    %v1691 = vadd.f32 %v1458, %v1594
    %v1692 = vadd.f32 %v1459, %v1678
    %v1693 = vld [vmem:[#allocation7] sm:$0x7]
    %v1695 = vlaneseq
    %v1696 = vshrl.u32 %v1695, 7
    %v1697 = vsub.s32 0, %v1696
    %v1698 = vrot.slane %v1693, %v1697
    %v1699 = vlaneseq
    %v1700 = vshrl.u32 %v1699, 7
    %v1701 = vsub.s32 1, %v1700
    %v1702 = vrot.slane %v1693, %v1701
    %v1703 = vlaneseq
    %v1704 = vshrl.u32 %v1703, 7
    %v1705 = vsub.s32 2, %v1704
    %v1706 = vrot.slane %v1693, %v1705
    %v1710 = vadd.f32 %v1681, %v1698
    %v1711 = vadd.f32 %v1682, %v1702
    %v1712 = vadd.f32 %v1683, %v1706
    %v1713 = vadd.f32 %v1684, %v1698
    %v1714 = vadd.f32 %v1685, %v1702
    %v1715 = vadd.f32 %v1686, %v1706
    %v1716 = vadd.f32 %v1687, %v1698
    %v1717 = vadd.f32 %v1688, %v1702
    %v1718 = vadd.f32 %v1689, %v1706
    %v1719 = vadd.f32 %v1690, %v1698
    %v1720 = vadd.f32 %v1691, %v1702
    %v1721 = vadd.f32 %v1692, %v1706
    %v1722 = vmax.f32 %v1710, 0.0
    %v1723 = vmax.f32 %v1711, 0.0
    %v1724 = vmax.f32 %v1712, 0.0
    %v1725 = vmax.f32 %v1713, 0.0
    %v1726 = vmax.f32 %v1714, 0.0
    %v1727 = vmax.f32 %v1715, 0.0
    %v1728 = vmax.f32 %v1716, 0.0
    %v1729 = vmax.f32 %v1717, 0.0
    %v1730 = vmax.f32 %v1718, 0.0
    %v1731 = vmax.f32 %v1719, 0.0
    %v1732 = vmax.f32 %v1720, 0.0
    %v1733 = vmax.f32 %v1721, 0.0
    %v1734 = vld [vmem:[#allocation8] sm:$0xff]
    %v1735 = vld [vmem:[#allocation8 + $0x8] sm:$0xff]
    %v1736 = vld [vmem:[#allocation8 + $0x10] sm:$0xff]
    %v1737 = vld [vmem:[#allocation8 + $0x18] sm:$0xff]
    %v1738 = vld [vmem:[#allocation8 + $0x20] sm:$0xff]
    %v1739 = vld [vmem:[#allocation8 + $0x28] sm:$0xff]
    %v1740 = vld [vmem:[#allocation8 + $0x30] sm:$0xff]
    %v1741 = vld [vmem:[#allocation8 + $0x38] sm:$0xff]
    %v1742 = vld [vmem:[#allocation8 + $0x40] sm:$0xff]
    %v1743 = vld [vmem:[#allocation8 + $0x48] sm:$0xff]
    %v1744 = vld [vmem:[#allocation8 + $0x50] sm:$0xff]
    %v1745 = vld [vmem:[#allocation8 + $0x58] sm:$0xff]
    %v1746 = vld [vmem:[#allocation8 + $0x60] sm:$0xff]
    %v1747 = vld [vmem:[#allocation8 + $0x68] sm:$0xff]
    %v1748 = vld [vmem:[#allocation8 + $0x70] sm:$0xff]
    %v1749 = vld [vmem:[#allocation8 + $0x78] sm:$0xff]
    %v1750 = vld [vmem:[#allocation8 + $0x80] sm:$0xff]
    %v1751 = vld [vmem:[#allocation8 + $0x88] sm:$0xff]
    %v1752 = vld [vmem:[#allocation8 + $0x90] sm:$0xff]
    %v1753 = vld [vmem:[#allocation8 + $0x98] sm:$0xff]
    %v1754 = vld [vmem:[#allocation8 + $0xa0] sm:$0xff]
    %v1755 = vld [vmem:[#allocation8 + $0xa8] sm:$0xff]
    %v1756 = vld [vmem:[#allocation8 + $0xb0] sm:$0xff]
    %v1757 = vld [vmem:[#allocation8 + $0xb8] sm:$0xff]
    %v1758 = vld [vmem:[#allocation8 + $0xc0] sm:$0xff]
    %v1759 = vld [vmem:[#allocation8 + $0xc8] sm:$0xff]
    %v1760 = vld [vmem:[#allocation8 + $0xd0] sm:$0xff]
    %v1761 = vld [vmem:[#allocation8 + $0xd8] sm:$0xff]
    %v1762 = vld [vmem:[#allocation8 + $0xe0] sm:$0xff]
    %v1763 = vld [vmem:[#allocation8 + $0xe8] sm:$0xff]
    %v1764 = vld [vmem:[#allocation8 + $0xf0] sm:$0xff]
    %v1765 = vld [vmem:[#allocation8 + $0xf8] sm:$0xff]
    %v1766 = vld [vmem:[#allocation8 + $0x100] sm:$0xff]
    %v1767 = vld [vmem:[#allocation8 + $0x108] sm:$0xff]
    %v1768 = vld [vmem:[#allocation8 + $0x110] sm:$0xff]
    %v1769 = vld [vmem:[#allocation8 + $0x118] sm:$0xff]
    %v1770 = vld [vmem:[#allocation8 + $0x120] sm:$0xff]
    %v1771 = vld [vmem:[#allocation8 + $0x128] sm:$0xff]
    %v1772 = vld [vmem:[#allocation8 + $0x130] sm:$0xff]
    %v1773 = vld [vmem:[#allocation8 + $0x138] sm:$0xff]
    %v1774 = vld [vmem:[#allocation8 + $0x140] sm:$0xff]
    %v1775 = vld [vmem:[#allocation8 + $0x148] sm:$0xff]
    %v1776 = vld [vmem:[#allocation8 + $0x150] sm:$0xff]
    %v1777 = vld [vmem:[#allocation8 + $0x158] sm:$0xff]
    %v1778 = vld [vmem:[#allocation8 + $0x160] sm:$0xff]
    %v1779 = vld [vmem:[#allocation8 + $0x168] sm:$0xff]
    %v1780 = vld [vmem:[#allocation8 + $0x170] sm:$0xff]
    %v1781 = vld [vmem:[#allocation8 + $0x178] sm:$0xff]
    %v1782 = vld [vmem:[#allocation8 + $0x180] sm:$0xff]
    %v1783 = vld [vmem:[#allocation8 + $0x188] sm:$0xff]
    %v1784 = vld [vmem:[#allocation8 + $0x190] sm:$0xff]
    %v1785 = vld [vmem:[#allocation8 + $0x198] sm:$0xff]
    %v1786 = vld [vmem:[#allocation8 + $0x1a0] sm:$0xff]
    %v1787 = vld [vmem:[#allocation8 + $0x1a8] sm:$0xff]
    %v1788 = vld [vmem:[#allocation8 + $0x1b0] sm:$0xff]
    %v1789 = vld [vmem:[#allocation8 + $0x1b8] sm:$0xff]
    %v1790 = vld [vmem:[#allocation8 + $0x1c0] sm:$0xff]
    %v1791 = vld [vmem:[#allocation8 + $0x1c8] sm:$0xff]
    %v1792 = vld [vmem:[#allocation8 + $0x1d0] sm:$0xff]
    %v1793 = vld [vmem:[#allocation8 + $0x1d8] sm:$0xff]
    %v1794 = vld [vmem:[#allocation8 + $0x1e0] sm:$0xff]
    %v1795 = vld [vmem:[#allocation8 + $0x1e8] sm:$0xff]
    %v1796 = vld [vmem:[#allocation8 + $0x1f0] sm:$0xff]
    %v1797 = vld [vmem:[#allocation8 + $0x1f8] sm:$0xff]
    %v1798 = vld [vmem:[#allocation8 + $0x200] sm:$0xff]
    %v1799 = vld [vmem:[#allocation8 + $0x208] sm:$0xff]
    %v1800 = vld [vmem:[#allocation8 + $0x210] sm:$0xff]
    %v1801 = vld [vmem:[#allocation8 + $0x218] sm:$0xff]
    %v1802 = vld [vmem:[#allocation8 + $0x220] sm:$0xff]
    %v1803 = vld [vmem:[#allocation8 + $0x228] sm:$0xff]
    %v1804 = vld [vmem:[#allocation8 + $0x230] sm:$0xff]
    %v1805 = vld [vmem:[#allocation8 + $0x238] sm:$0xff]
    %v1806 = vld [vmem:[#allocation8 + $0x240] sm:$0xff]
    %v1807 = vld [vmem:[#allocation8 + $0x248] sm:$0xff]
    %v1808 = vld [vmem:[#allocation8 + $0x250] sm:$0xff]
    %v1809 = vld [vmem:[#allocation8 + $0x258] sm:$0xff]
    %v1810 = vld [vmem:[#allocation8 + $0x260] sm:$0xff]
    %v1811 = vld [vmem:[#allocation8 + $0x268] sm:$0xff]
    %v1812 = vld [vmem:[#allocation8 + $0x270] sm:$0xff]
    %v1813 = vld [vmem:[#allocation8 + $0x278] sm:$0xff]
    %v1814 = vld [vmem:[#allocation8 + $0x280] sm:$0xff]
    %v1815 = vld [vmem:[#allocation8 + $0x288] sm:$0xff]
    %v1816 = vld [vmem:[#allocation8 + $0x290] sm:$0xff]
    %v1817 = vld [vmem:[#allocation8 + $0x298] sm:$0xff]
    %v1818 = vld [vmem:[#allocation8 + $0x2a0] sm:$0xff]
    %v1819 = vld [vmem:[#allocation8 + $0x2a8] sm:$0xff]
    %v1820 = vld [vmem:[#allocation8 + $0x2b0] sm:$0xff]
    %v1821 = vld [vmem:[#allocation8 + $0x2b8] sm:$0xff]
    %v1822 = vld [vmem:[#allocation8 + $0x2c0] sm:$0xff]
    %v1823 = vld [vmem:[#allocation8 + $0x2c8] sm:$0xff]
    %v1824 = vld [vmem:[#allocation8 + $0x2d0] sm:$0xff]
    %v1825 = vld [vmem:[#allocation8 + $0x2d8] sm:$0xff]
    %v1826 = vld [vmem:[#allocation8 + $0x2e0] sm:$0xff]
    %v1827 = vld [vmem:[#allocation8 + $0x2e8] sm:$0xff]
    %v1828 = vld [vmem:[#allocation8 + $0x2f0] sm:$0xff]
    %v1829 = vld [vmem:[#allocation8 + $0x2f8] sm:$0xff]
    %v1830 = vld [vmem:[#allocation8 + $0x300] sm:$0xff]
    %v1831 = vld [vmem:[#allocation8 + $0x308] sm:$0xff]
    %v1832 = vld [vmem:[#allocation8 + $0x310] sm:$0xff]
    %v1833 = vld [vmem:[#allocation8 + $0x318] sm:$0xff]
    %v1834 = vld [vmem:[#allocation8 + $0x320] sm:$0xff]
    %v1835 = vld [vmem:[#allocation8 + $0x328] sm:$0xff]
    %v1836 = vld [vmem:[#allocation8 + $0x330] sm:$0xff]
    %v1837 = vld [vmem:[#allocation8 + $0x338] sm:$0xff]
    %v1838 = vld [vmem:[#allocation8 + $0x340] sm:$0xff]
    %v1839 = vld [vmem:[#allocation8 + $0x348] sm:$0xff]
    %v1840 = vld [vmem:[#allocation8 + $0x350] sm:$0xff]
    %v1841 = vld [vmem:[#allocation8 + $0x358] sm:$0xff]
    %v1842 = vld [vmem:[#allocation8 + $0x360] sm:$0xff]
    %v1843 = vld [vmem:[#allocation8 + $0x368] sm:$0xff]
    %v1844 = vld [vmem:[#allocation8 + $0x370] sm:$0xff]
    %v1845 = vld [vmem:[#allocation8 + $0x378] sm:$0xff]
    %v1846 = vld [vmem:[#allocation8 + $0x380] sm:$0xff]
    %v1847 = vld [vmem:[#allocation8 + $0x388] sm:$0xff]
    %v1848 = vld [vmem:[#allocation8 + $0x390] sm:$0xff]
    %v1849 = vld [vmem:[#allocation8 + $0x398] sm:$0xff]
    %v1850 = vld [vmem:[#allocation8 + $0x3a0] sm:$0xff]
    %v1851 = vld [vmem:[#allocation8 + $0x3a8] sm:$0xff]
    %v1852 = vld [vmem:[#allocation8 + $0x3b0] sm:$0xff]
    %v1853 = vld [vmem:[#allocation8 + $0x3b8] sm:$0xff]
    %v1854 = vld [vmem:[#allocation8 + $0x3c0] sm:$0xff]
    %v1855 = vld [vmem:[#allocation8 + $0x3c8] sm:$0xff]
    %v1856 = vld [vmem:[#allocation8 + $0x3d0] sm:$0xff]
    %v1857 = vld [vmem:[#allocation8 + $0x3d8] sm:$0xff]
    %v1858 = vld [vmem:[#allocation8 + $0x3e0] sm:$0xff]
    %v1859 = vld [vmem:[#allocation8 + $0x3e8] sm:$0xff]
    %v1860 = vld [vmem:[#allocation8 + $0x3f0] sm:$0xff]
    %v1861 = vld [vmem:[#allocation8 + $0x3f8] sm:$0xff]
    %v1862 = vld [vmem:[#allocation8 + $0x400] sm:$0xff]
    %v1863 = vld [vmem:[#allocation8 + $0x408] sm:$0xff]
    %v1864 = vld [vmem:[#allocation8 + $0x410] sm:$0xff]
    %v1865 = vld [vmem:[#allocation8 + $0x418] sm:$0xff]
    %v1866 = vld [vmem:[#allocation8 + $0x420] sm:$0xff]
    %v1867 = vld [vmem:[#allocation8 + $0x428] sm:$0xff]
    %v1868 = vld [vmem:[#allocation8 + $0x430] sm:$0xff]
    %v1869 = vld [vmem:[#allocation8 + $0x438] sm:$0xff]
    %v1870 = vld [vmem:[#allocation8 + $0x440] sm:$0xff]
    %v1871 = vld [vmem:[#allocation8 + $0x448] sm:$0xff]
    %v1872 = vld [vmem:[#allocation8 + $0x450] sm:$0xff]
    %v1873 = vld [vmem:[#allocation8 + $0x458] sm:$0xff]
    %v1874 = vld [vmem:[#allocation8 + $0x460] sm:$0xff]
    %v1875 = vld [vmem:[#allocation8 + $0x468] sm:$0xff]
    %v1876 = vld [vmem:[#allocation8 + $0x470] sm:$0xff]
    %v1877 = vld [vmem:[#allocation8 + $0x478] sm:$0xff]
    %v1878 = vld [vmem:[#allocation8 + $0x480] sm:$0xff]
    %v1879 = vld [vmem:[#allocation8 + $0x488] sm:$0xff]
    %v1880 = vld [vmem:[#allocation8 + $0x490] sm:$0xff]
    %v1881 = vld [vmem:[#allocation8 + $0x498] sm:$0xff]
    %v1882 = vld [vmem:[#allocation8 + $0x4a0] sm:$0xff]
    %v1883 = vld [vmem:[#allocation8 + $0x4a8] sm:$0xff]
    %v1884 = vld [vmem:[#allocation8 + $0x4b0] sm:$0xff]
    %v1885 = vld [vmem:[#allocation8 + $0x4b8] sm:$0xff]
    %v1886 = vld [vmem:[#allocation8 + $0x4c0] sm:$0xff]
    %v1887 = vld [vmem:[#allocation8 + $0x4c8] sm:$0xff]
    %v1888 = vld [vmem:[#allocation8 + $0x4d0] sm:$0xff]
    %v1889 = vld [vmem:[#allocation8 + $0x4d8] sm:$0xff]
    %v1890 = vld [vmem:[#allocation8 + $0x4e0] sm:$0xff]
    %v1891 = vld [vmem:[#allocation8 + $0x4e8] sm:$0xff]
    %v1892 = vld [vmem:[#allocation8 + $0x4f0] sm:$0xff]
    %v1893 = vld [vmem:[#allocation8 + $0x4f8] sm:$0xff]
    %v1894 = vld [vmem:[#allocation8 + $0x500] sm:$0xff]
    %v1895 = vld [vmem:[#allocation8 + $0x508] sm:$0xff]
    %v1896 = vld [vmem:[#allocation8 + $0x510] sm:$0xff]
    %v1897 = vld [vmem:[#allocation8 + $0x518] sm:$0xff]
    %v1898 = vld [vmem:[#allocation8 + $0x520] sm:$0xff]
    %v1899 = vld [vmem:[#allocation8 + $0x528] sm:$0xff]
    %v1900 = vld [vmem:[#allocation8 + $0x530] sm:$0xff]
    %v1901 = vld [vmem:[#allocation8 + $0x538] sm:$0xff]
    %v1902 = vld [vmem:[#allocation8 + $0x540] sm:$0xff]
    %v1903 = vld [vmem:[#allocation8 + $0x548] sm:$0xff]
    %v1904 = vld [vmem:[#allocation8 + $0x550] sm:$0xff]
    %v1905 = vld [vmem:[#allocation8 + $0x558] sm:$0xff]
    %v1906 = vld [vmem:[#allocation8 + $0x560] sm:$0xff]
    %v1907 = vld [vmem:[#allocation8 + $0x568] sm:$0xff]
    %v1908 = vld [vmem:[#allocation8 + $0x570] sm:$0xff]
    %v1909 = vld [vmem:[#allocation8 + $0x578] sm:$0xff]
    %v1910 = vld [vmem:[#allocation8 + $0x580] sm:$0xff]
    %v1911 = vld [vmem:[#allocation8 + $0x588] sm:$0xff]
    %v1912 = vld [vmem:[#allocation8 + $0x590] sm:$0xff]
    %v1913 = vld [vmem:[#allocation8 + $0x598] sm:$0xff]
    %v1914 = vld [vmem:[#allocation8 + $0x5a0] sm:$0xff]
    %v1915 = vld [vmem:[#allocation8 + $0x5a8] sm:$0xff]
    %v1916 = vld [vmem:[#allocation8 + $0x5b0] sm:$0xff]
    %v1917 = vld [vmem:[#allocation8 + $0x5b8] sm:$0xff]
    %v1918 = vld [vmem:[#allocation8 + $0x5c0] sm:$0xff]
    %v1919 = vld [vmem:[#allocation8 + $0x5c8] sm:$0xff]
    %v1920 = vld [vmem:[#allocation8 + $0x5d0] sm:$0xff]
    %v1921 = vld [vmem:[#allocation8 + $0x5d8] sm:$0xff]
    %v1922 = vld [vmem:[#allocation8 + $0x5e0] sm:$0xff]
    %v1923 = vld [vmem:[#allocation8 + $0x5e8] sm:$0xff]
    %v1924 = vld [vmem:[#allocation8 + $0x5f0] sm:$0xff]
    %v1925 = vld [vmem:[#allocation8 + $0x5f8] sm:$0xff]
    %v1926 = vld [vmem:[#allocation10] sm:$0xf]
    %v1928 = vlaneseq
    %v1929 = vshrl.u32 %v1928, 7
    %v1930 = vsub.s32 0, %v1929
    %v1931 = vrot.slane %v1926, %v1930
    %v1932 = vlaneseq
    %v1933 = vshrl.u32 %v1932, 7
    %v1934 = vsub.s32 1, %v1933
    %v1935 = vrot.slane %v1926, %v1934
    %v1936 = vlaneseq
    %v1937 = vshrl.u32 %v1936, 7
    %v1938 = vsub.s32 2, %v1937
    %v1939 = vrot.slane %v1926, %v1938
    %v1940 = vlaneseq
    %v1941 = vshrl.u32 %v1940, 7
    %v1942 = vsub.s32 3, %v1941
    %v1943 = vrot.slane %v1926, %v1942
    %1948 = vmatprep.subr.mxu0 %v1735
    %1949 = vmatpush1.msra.mxu0 %v1734
    %1950 = vmatprep.subr.mxu0 %v1739
    %1951 = vmatpush1.msra.mxu0 %v1738
    %1952 = vmatprep.subr.mxu0 %v1743
    %1953 = vmatpush1.msra.mxu0 %v1742
    %1954 = vmatprep.subr.mxu0 %v1747
    %1955 = vmatpush1.msra.mxu0 %v1746
    %1956 = vmatprep.subr.mxu0 %v1751
    %1957 = vmatpush1.msra.mxu0 %v1750
    %1958 = vmatprep.subr.mxu0 %v1755
    %1959 = vmatpush1.msra.mxu0 %v1754
    %1960 = vmatprep.subr.mxu0 %v1759
    %1961 = vmatpush1.msra.mxu0 %v1758
    %1962 = vmatprep.subr.mxu0 %v1763
    %1963 = vmatpush1.msra.mxu0 %v1762
    %1964 = vmatprep.subr.mxu0 %v1767
    %1965 = vmatpush1.msra.mxu0 %v1766
    %1966 = vmatprep.subr.mxu0 %v1771
    %1967 = vmatpush1.msra.mxu0 %v1770
    %1968 = vmatprep.subr.mxu0 %v1775
    %1969 = vmatpush1.msra.mxu0 %v1774
    %1970 = vmatprep.subr.mxu0 %v1779
    %1971 = vmatpush1.msra.mxu0 %v1778
    %1972 = vmatprep.subr.mxu0 %v1783
    %1973 = vmatpush1.msra.mxu0 %v1782
    %1974 = vmatprep.subr.mxu0 %v1787
    %1975 = vmatpush1.msra.mxu0 %v1786
    %1976 = vmatprep.subr.mxu0 %v1791
    %1977 = vmatpush1.msra.mxu0 %v1790
    %1978 = vmatprep.subr.mxu0 %v1795
    %1979 = vmatpush1.msra.mxu0 %v1794
    %1980 = vmatprep.subr.mxu0 %v1799
    %1981 = vmatpush1.msra.mxu0 %v1798
    %1982 = vmatprep.subr.mxu0 %v1803
    %1983 = vmatpush1.msra.mxu0 %v1802
    %1984 = vmatprep.subr.mxu0 %v1807
    %1985 = vmatpush1.msra.mxu0 %v1806
    %1986 = vmatprep.subr.mxu0 %v1811
    %1987 = vmatpush1.msra.mxu0 %v1810
    %1988 = vmatprep.subr.mxu0 %v1815
    %1989 = vmatpush1.msra.mxu0 %v1814
    %1990 = vmatprep.subr.mxu0 %v1819
    %1991 = vmatpush1.msra.mxu0 %v1818
    %1992 = vmatprep.subr.mxu0 %v1823
    %1993 = vmatpush1.msra.mxu0 %v1822
    %1994 = vmatprep.subr.mxu0 %v1827
    %1995 = vmatpush1.msra.mxu0 %v1826
    %1996 = vmatprep.subr.mxu0 %v1831
    %1997 = vmatpush1.msra.mxu0 %v1830
    %1998 = vmatprep.subr.mxu0 %v1835
    %1999 = vmatpush1.msra.mxu0 %v1834
    %2000 = vmatprep.subr.mxu0 %v1839
    %2001 = vmatpush1.msra.mxu0 %v1838
    %2002 = vmatprep.subr.mxu0 %v1843
    %2003 = vmatpush1.msra.mxu0 %v1842
    %2004 = vmatprep.subr.mxu0 %v1847
    %2005 = vmatpush1.msra.mxu0 %v1846
    %2006 = vmatprep.subr.mxu0 %v1851
    %2007 = vmatpush1.msra.mxu0 %v1850
    %2008 = vmatprep.subr.mxu0 %v1855
    %2009 = vmatpush1.msra.mxu0 %v1854
    %2010 = vmatprep.subr.mxu0 %v1859
    %2011 = vmatpush1.msra.mxu0 %v1858
    %2012 = vmatprep.mubr.f32.mxu0 %v1723
    %2013 = vmatmul.mubr.f32.gmra.mrb[0].mxu0 %v1722
    %v2014 = vpop.f32.mrb[0].mxu0
    %v2015 = vadd.f32 %v1931, %v2014
    %v2016 = vpop.f32.mrb[0].mxu0
    %v2017 = vadd.f32 %v1935, %v2016
    %2018 = vmatprep.mubr.f32.mxu0 %v1726
    %2019 = vmatmul.mubr.f32.gmra.mrb[0].mxu0 %v1725
    %v2020 = vpop.f32.mrb[0].mxu0
    %v2021 = vadd.f32 %v1931, %v2020
    %v2022 = vpop.f32.mrb[0].mxu0
    %v2023 = vadd.f32 %v1935, %v2022
    %2024 = vmatprep.mubr.f32.mxu0 %v1729
    %2025 = vmatmul.mubr.f32.gmra.mrb[0].mxu0 %v1728
    %v2026 = vpop.f32.mrb[0].mxu0
    %v2027 = vadd.f32 %v1931, %v2026
    %v2028 = vpop.f32.mrb[0].mxu0
    %v2029 = vadd.f32 %v1935, %v2028
    %2030 = vmatprep.mubr.f32.mxu0 %v1732
    %2031 = vmatmul.mubr.f32.gmra.mrb[0].mxu0 %v1731
    %v2032 = vpop.f32.mrb[0].mxu0
    %v2033 = vadd.f32 %v1931, %v2032
    %v2034 = vpop.f32.mrb[0].mxu0
    %v2035 = vadd.f32 %v1935, %v2034
    %2036 = vdwg.mxu0
    %2037 = vmatprep.subr.mxu0 %v1863
    %2038 = vmatpush1.msra.mxu0 %v1862
    %2039 = vmatprep.subr.mxu0 %v1867
    %2040 = vmatpush1.msra.mxu0 %v1866
    %2041 = vmatprep.subr.mxu0 %v1871
    %2042 = vmatpush1.msra.mxu0 %v1870
    %2043 = vmatprep.subr.mxu0 %v1875
    %2044 = vmatpush1.msra.mxu0 %v1874
    %2045 = vmatprep.subr.mxu0 %v1879
    %2046 = vmatpush1.msra.mxu0 %v1878
    %2047 = vmatprep.subr.mxu0 %v1883
    %2048 = vmatpush1.msra.mxu0 %v1882
    %2049 = vmatprep.subr.mxu0 %v1887
    %2050 = vmatpush1.msra.mxu0 %v1886
    %2051 = vmatprep.subr.mxu0 %v1891
    %2052 = vmatpush1.msra.mxu0 %v1890
    %2053 = vmatprep.subr.mxu0 %v1895
    %2054 = vmatpush1.msra.mxu0 %v1894
    %2055 = vmatprep.subr.mxu0 %v1899
    %2056 = vmatpush1.msra.mxu0 %v1898
    %2057 = vmatprep.subr.mxu0 %v1903
    %2058 = vmatpush1.msra.mxu0 %v1902
    %2059 = vmatprep.subr.mxu0 %v1907
    %2060 = vmatpush1.msra.mxu0 %v1906
    %2061 = vmatprep.subr.mxu0 %v1911
    %2062 = vmatpush1.msra.mxu0 %v1910
    %2063 = vmatprep.subr.mxu0 %v1915
    %2064 = vmatpush1.msra.mxu0 %v1914
    %2065 = vmatprep.subr.mxu0 %v1919
    %2066 = vmatpush1.msra.mxu0 %v1918
    %2067 = vmatprep.subr.mxu0 %v1923
    %2068 = vmatpush1.msra.mxu0 %v1922
    %2069 = vmatprep.subr.mxu0 0.0
    %2070 = vmatpush1.msra.mxu0 0.0
    %2071 = vmatprep.subr.mxu0 0.0
    %2072 = vmatpush1.msra.mxu0 0.0
    %2073 = vmatprep.subr.mxu0 0.0
    %2074 = vmatpush1.msra.mxu0 0.0
    %2075 = vmatprep.subr.mxu0 0.0
    %2076 = vmatpush1.msra.mxu0 0.0
    %2077 = vmatprep.subr.mxu0 0.0
    %2078 = vmatpush1.msra.mxu0 0.0
    %2079 = vmatprep.subr.mxu0 0.0
    %2080 = vmatpush1.msra.mxu0 0.0
    %2081 = vmatprep.subr.mxu0 0.0
    %2082 = vmatpush1.msra.mxu0 0.0
    %2083 = vmatprep.subr.mxu0 0.0
    %2084 = vmatpush1.msra.mxu0 0.0
    %2085 = vmatprep.subr.mxu0 0.0
    %2086 = vmatpush1.msra.mxu0 0.0
    %2087 = vmatprep.subr.mxu0 0.0
    %2088 = vmatpush1.msra.mxu0 0.0
    %2089 = vmatprep.subr.mxu0 0.0
    %2090 = vmatpush1.msra.mxu0 0.0
    %2091 = vmatprep.subr.mxu0 0.0
    %2092 = vmatpush1.msra.mxu0 0.0
    %2093 = vmatprep.subr.mxu0 0.0
    %2094 = vmatpush1.msra.mxu0 0.0
    %2095 = vmatprep.subr.mxu0 0.0
    %2096 = vmatpush1.msra.mxu0 0.0
    %2097 = vmatprep.subr.mxu0 0.0
    %2098 = vmatpush1.msra.mxu0 0.0
    %2099 = vmatprep.subr.mxu0 0.0
    %2100 = vmatpush1.msra.mxu0 0.0
    %2101 = vmatprep.mubr.f32.mxu0 0.0
    %2102 = vmatmul.mubr.f32.gmra.mrb[0].mxu0 %v1724
    %v2103 = vpop.f32.mrb[0].mxu0
    %v2104 = vadd.f32 %v2015, %v2103
    %v2105 = vpop.f32.mrb[0].mxu0
    %v2106 = vadd.f32 %v2017, %v2105
    %2107 = vmatprep.mubr.f32.mxu0 0.0
    %2108 = vmatmul.mubr.f32.gmra.mrb[0].mxu0 %v1727
    %v2109 = vpop.f32.mrb[0].mxu0
    %v2110 = vadd.f32 %v2021, %v2109
    %v2111 = vpop.f32.mrb[0].mxu0
    %v2112 = vadd.f32 %v2023, %v2111
    %2113 = vmatprep.mubr.f32.mxu0 0.0
    %2114 = vmatmul.mubr.f32.gmra.mrb[0].mxu0 %v1730
    %v2115 = vpop.f32.mrb[0].mxu0
    %v2116 = vadd.f32 %v2027, %v2115
    %v2117 = vpop.f32.mrb[0].mxu0
    %v2118 = vadd.f32 %v2029, %v2117
    %2119 = vmatprep.mubr.f32.mxu0 0.0
    %2120 = vmatmul.mubr.f32.gmra.mrb[0].mxu0 %v1733
    %v2121 = vpop.f32.mrb[0].mxu0
    %v2122 = vadd.f32 %v2033, %v2121
    %v2123 = vpop.f32.mrb[0].mxu0
    %v2124 = vadd.f32 %v2035, %v2123
    %2125 = vdwg.mxu0
    %2126 = vmatprep.subr.mxu0 %v1737
    %2127 = vmatpush1.msra.mxu0 %v1736
    %2128 = vmatprep.subr.mxu0 %v1741
    %2129 = vmatpush1.msra.mxu0 %v1740
    %2130 = vmatprep.subr.mxu0 %v1745
    %2131 = vmatpush1.msra.mxu0 %v1744
    %2132 = vmatprep.subr.mxu0 %v1749
    %2133 = vmatpush1.msra.mxu0 %v1748
    %2134 = vmatprep.subr.mxu0 %v1753
    %2135 = vmatpush1.msra.mxu0 %v1752
    %2136 = vmatprep.subr.mxu0 %v1757
    %2137 = vmatpush1.msra.mxu0 %v1756
    %2138 = vmatprep.subr.mxu0 %v1761
    %2139 = vmatpush1.msra.mxu0 %v1760
    %2140 = vmatprep.subr.mxu0 %v1765
    %2141 = vmatpush1.msra.mxu0 %v1764
    %2142 = vmatprep.subr.mxu0 %v1769
    %2143 = vmatpush1.msra.mxu0 %v1768
    %2144 = vmatprep.subr.mxu0 %v1773
    %2145 = vmatpush1.msra.mxu0 %v1772
    %2146 = vmatprep.subr.mxu0 %v1777
    %2147 = vmatpush1.msra.mxu0 %v1776
    %2148 = vmatprep.subr.mxu0 %v1781
    %2149 = vmatpush1.msra.mxu0 %v1780
    %2150 = vmatprep.subr.mxu0 %v1785
    %2151 = vmatpush1.msra.mxu0 %v1784
    %2152 = vmatprep.subr.mxu0 %v1789
    %2153 = vmatpush1.msra.mxu0 %v1788
    %2154 = vmatprep.subr.mxu0 %v1793
    %2155 = vmatpush1.msra.mxu0 %v1792
    %2156 = vmatprep.subr.mxu0 %v1797
    %2157 = vmatpush1.msra.mxu0 %v1796
    %2158 = vmatprep.subr.mxu0 %v1801
    %2159 = vmatpush1.msra.mxu0 %v1800
    %2160 = vmatprep.subr.mxu0 %v1805
    %2161 = vmatpush1.msra.mxu0 %v1804
    %2162 = vmatprep.subr.mxu0 %v1809
    %2163 = vmatpush1.msra.mxu0 %v1808
    %2164 = vmatprep.subr.mxu0 %v1813
    %2165 = vmatpush1.msra.mxu0 %v1812
    %2166 = vmatprep.subr.mxu0 %v1817
    %2167 = vmatpush1.msra.mxu0 %v1816
    %2168 = vmatprep.subr.mxu0 %v1821
    %2169 = vmatpush1.msra.mxu0 %v1820
    %2170 = vmatprep.subr.mxu0 %v1825
    %2171 = vmatpush1.msra.mxu0 %v1824
    %2172 = vmatprep.subr.mxu0 %v1829
    %2173 = vmatpush1.msra.mxu0 %v1828
    %2174 = vmatprep.subr.mxu0 %v1833
    %2175 = vmatpush1.msra.mxu0 %v1832
    %2176 = vmatprep.subr.mxu0 %v1837
    %2177 = vmatpush1.msra.mxu0 %v1836
    %2178 = vmatprep.subr.mxu0 %v1841
    %2179 = vmatpush1.msra.mxu0 %v1840
    %2180 = vmatprep.subr.mxu0 %v1845
    %2181 = vmatpush1.msra.mxu0 %v1844
    %2182 = vmatprep.subr.mxu0 %v1849
    %2183 = vmatpush1.msra.mxu0 %v1848
    %2184 = vmatprep.subr.mxu0 %v1853
    %2185 = vmatpush1.msra.mxu0 %v1852
    %2186 = vmatprep.subr.mxu0 %v1857
    %2187 = vmatpush1.msra.mxu0 %v1856
    %2188 = vmatprep.subr.mxu0 %v1861
    %2189 = vmatpush1.msra.mxu0 %v1860
    %2190 = vmatprep.mubr.f32.mxu0 %v1723
    %2191 = vmatmul.mubr.f32.gmra.mrb[0].mxu0 %v1722
    %v2192 = vpop.f32.mrb[0].mxu0
    %v2193 = vadd.f32 %v1939, %v2192
    %v2194 = vpop.f32.mrb[0].mxu0
    %v2195 = vadd.f32 %v1943, %v2194
    %2196 = vmatprep.mubr.f32.mxu0 %v1726
    %2197 = vmatmul.mubr.f32.gmra.mrb[0].mxu0 %v1725
    %v2198 = vpop.f32.mrb[0].mxu0
    %v2199 = vadd.f32 %v1939, %v2198
    %v2200 = vpop.f32.mrb[0].mxu0
    %v2201 = vadd.f32 %v1943, %v2200
    %2202 = vmatprep.mubr.f32.mxu0 %v1729
    %2203 = vmatmul.mubr.f32.gmra.mrb[0].mxu0 %v1728
    %v2204 = vpop.f32.mrb[0].mxu0
    %v2205 = vadd.f32 %v1939, %v2204
    %v2206 = vpop.f32.mrb[0].mxu0
    %v2207 = vadd.f32 %v1943, %v2206
    %2208 = vmatprep.mubr.f32.mxu0 %v1732
    %2209 = vmatmul.mubr.f32.gmra.mrb[0].mxu0 %v1731
    %v2210 = vpop.f32.mrb[0].mxu0
    %v2211 = vadd.f32 %v1939, %v2210
    %v2212 = vpop.f32.mrb[0].mxu0
    %v2213 = vadd.f32 %v1943, %v2212
    %2214 = vdwg.mxu0
    %2215 = vmatprep.subr.mxu0 %v1865
    %2216 = vmatpush1.msra.mxu0 %v1864
    %2217 = vmatprep.subr.mxu0 %v1869
    %2218 = vmatpush1.msra.mxu0 %v1868
    %2219 = vmatprep.subr.mxu0 %v1873
    %2220 = vmatpush1.msra.mxu0 %v1872
    %2221 = vmatprep.subr.mxu0 %v1877
    %2222 = vmatpush1.msra.mxu0 %v1876
    %2223 = vmatprep.subr.mxu0 %v1881
    %2224 = vmatpush1.msra.mxu0 %v1880
    %2225 = vmatprep.subr.mxu0 %v1885
    %2226 = vmatpush1.msra.mxu0 %v1884
    %2227 = vmatprep.subr.mxu0 %v1889
    %2228 = vmatpush1.msra.mxu0 %v1888
    %2229 = vmatprep.subr.mxu0 %v1893
    %2230 = vmatpush1.msra.mxu0 %v1892
    %2231 = vmatprep.subr.mxu0 %v1897
    %2232 = vmatpush1.msra.mxu0 %v1896
    %2233 = vmatprep.subr.mxu0 %v1901
    %2234 = vmatpush1.msra.mxu0 %v1900
    %2235 = vmatprep.subr.mxu0 %v1905
    %2236 = vmatpush1.msra.mxu0 %v1904
    %2237 = vmatprep.subr.mxu0 %v1909
    %2238 = vmatpush1.msra.mxu0 %v1908
    %2239 = vmatprep.subr.mxu0 %v1913
    %2240 = vmatpush1.msra.mxu0 %v1912
    %2241 = vmatprep.subr.mxu0 %v1917
    %2242 = vmatpush1.msra.mxu0 %v1916
    %2243 = vmatprep.subr.mxu0 %v1921
    %2244 = vmatpush1.msra.mxu0 %v1920
    %2245 = vmatprep.subr.mxu0 %v1925
    %2246 = vmatpush1.msra.mxu0 %v1924
    %2247 = vmatprep.subr.mxu0 0.0
    %2248 = vmatpush1.msra.mxu0 0.0
    %2249 = vmatprep.subr.mxu0 0.0
    %2250 = vmatpush1.msra.mxu0 0.0
    %2251 = vmatprep.subr.mxu0 0.0
    %2252 = vmatpush1.msra.mxu0 0.0
    %2253 = vmatprep.subr.mxu0 0.0
    %2254 = vmatpush1.msra.mxu0 0.0
    %2255 = vmatprep.subr.mxu0 0.0
    %2256 = vmatpush1.msra.mxu0 0.0
    %2257 = vmatprep.subr.mxu0 0.0
    %2258 = vmatpush1.msra.mxu0 0.0
    %2259 = vmatprep.subr.mxu0 0.0
    %2260 = vmatpush1.msra.mxu0 0.0
    %2261 = vmatprep.subr.mxu0 0.0
    %2262 = vmatpush1.msra.mxu0 0.0
    %2263 = vmatprep.subr.mxu0 0.0
    %2264 = vmatpush1.msra.mxu0 0.0
    %2265 = vmatprep.subr.mxu0 0.0
    %2266 = vmatpush1.msra.mxu0 0.0
    %2267 = vmatprep.subr.mxu0 0.0
    %2268 = vmatpush1.msra.mxu0 0.0
    %2269 = vmatprep.subr.mxu0 0.0
    %2270 = vmatpush1.msra.mxu0 0.0
    %2271 = vmatprep.subr.mxu0 0.0
    %2272 = vmatpush1.msra.mxu0 0.0
    %2273 = vmatprep.subr.mxu0 0.0
    %2274 = vmatpush1.msra.mxu0 0.0
    %2275 = vmatprep.subr.mxu0 0.0
    %2276 = vmatpush1.msra.mxu0 0.0
    %2277 = vmatprep.subr.mxu0 0.0
    %2278 = vmatpush1.msra.mxu0 0.0
    %2279 = vmatprep.mubr.f32.mxu0 0.0
    %2280 = vmatmul.mubr.f32.gmra.mrb[0].mxu0 %v1724
    %v2281 = vpop.f32.mrb[0].mxu0
    %v2282 = vadd.f32 %v2193, %v2281
    %v2283 = vpop.f32.mrb[0].mxu0
    %v2284 = vadd.f32 %v2195, %v2283
    %2285 = vmatprep.mubr.f32.mxu0 0.0
    %2286 = vmatmul.mubr.f32.gmra.mrb[0].mxu0 %v1727
    %v2287 = vpop.f32.mrb[0].mxu0
    %v2288 = vadd.f32 %v2199, %v2287
    %v2289 = vpop.f32.mrb[0].mxu0
    %v2290 = vadd.f32 %v2201, %v2289
    %2291 = vmatprep.mubr.f32.mxu0 0.0
    %2292 = vmatmul.mubr.f32.gmra.mrb[0].mxu0 %v1730
    %v2293 = vpop.f32.mrb[0].mxu0
    %v2294 = vadd.f32 %v2205, %v2293
    %v2295 = vpop.f32.mrb[0].mxu0
    %v2296 = vadd.f32 %v2207, %v2295
    %2297 = vmatprep.mubr.f32.mxu0 0.0
    %2298 = vmatmul.mubr.f32.gmra.mrb[0].mxu0 %v1733
    %v2299 = vpop.f32.mrb[0].mxu0
    %v2300 = vadd.f32 %v2211, %v2299
    %v2301 = vpop.f32.mrb[0].mxu0
    %v2302 = vadd.f32 %v2213, %v2301
    %2303 = vdwg.mxu0
    %2304 = vst [vmem:[#allocation11] sm:$0xff] %v2104
    %2305 = vst [vmem:[#allocation11 + $0x8] sm:$0xff] %v2106
    %2306 = vst [vmem:[#allocation11 + $0x10] sm:$0xff] %v2282
    %2307 = vst [vmem:[#allocation11 + $0x18] sm:$0xff] %v2284
    %2308 = vst [vmem:[#allocation11 + $0x20] sm:$0xff] %v2110
    %2309 = vst [vmem:[#allocation11 + $0x28] sm:$0xff] %v2112
    %2310 = vst [vmem:[#allocation11 + $0x30] sm:$0xff] %v2288
    %2311 = vst [vmem:[#allocation11 + $0x38] sm:$0xff] %v2290
    %2312 = vst [vmem:[#allocation11 + $0x40] sm:$0xff] %v2116
    %2313 = vst [vmem:[#allocation11 + $0x48] sm:$0xff] %v2118
    %2314 = vst [vmem:[#allocation11 + $0x50] sm:$0xff] %v2294
    %2315 = vst [vmem:[#allocation11 + $0x58] sm:$0xff] %v2296
    %2316 = vst [vmem:[#allocation11 + $0x60] sm:$0xff] %v2122
    %2317 = vst [vmem:[#allocation11 + $0x68] sm:$0xff] %v2124
    %2318 = vst [vmem:[#allocation11 + $0x70] sm:$0xff] %v2300
    %2319 = vst [vmem:[#allocation11 + $0x78] sm:$0xff] %v2302
    // Predicated region
    $region42: #{tpu_custom_call.1} parent=1 // pred_check
      _
    $region43: #{tpu_custom_call.1} parent=1 // pred_check_branch
      %2321 = sbr.rel (0) target = $region45
    $region44: #{tpu_custom_call.1} parent=1 // pred_region
      %s2323 = ssub.s32 2048, 2048
      %2324 = vsyncadd [#allocation4], %s2323
      %s2325 = sshll.u32 [#allocation11], 4
      %s2326 = int_to_ptr.vmem [resolvable:$true] %s2325
      %2331 = dma.vmem_to_hbm [thread:$0]  %s2326, 2048, %s5, [#allocation4], 512, 512, 32
    $region45: #{tpu_custom_call.1} parent=1 // pred_fallthru
      _
    // Predicated region
    $region46: #{tpu_custom_call.1} parent=1 // pred_check
      _
    $region47: #{tpu_custom_call.1} parent=1 // pred_check_branch
      %2333 = sbr.rel (0) target = $region49
    $region48: #{tpu_custom_call.1} parent=1 // pred_region
      %2334 = dma.done [#allocation4], 2048
    $region49: #{tpu_custom_call.1} parent=1 // pred_fallthru
      _
    %2335 = vsyncpa [#allocation3], 1
    %2336 = vsyncpa [#allocation6], 1
    %2337 = vsyncpa [#allocation9], 1
    %2338 = vsyncpa [#allocation4], 1

</llo_original>
